<compile_context>
chip_gen: v5e
topology: v5e:2x2
jax: 0.10.0
libtpu: 0.0.40
codegen_flags: <defaults>
</compile_context>

<pallas_src>
import jax
import jax.numpy as jnp
import numpy as np
from jax.experimental import pallas as pl
from jax.experimental.pallas import tpu as pltpu

EPS = 1e-7
_PAIRS = ((0, 0), (0, 1), (0, 2), (1, 1), (1, 2), (2, 2))
_NT = 1 + 3 + 9 + 6 + 18       # 37 packed interaction-tensor columns
_C_T1 = 1                      # T1_x..z
_C_T2F = 4                     # T2 full, row-major [i*3+j]
_C_T2S = 13                    # symmetrized T2, pair order
_C_T3S = 19                    # symmetrized T3, col = 19 + 3*pair + i


def _multipole_kernel(
    # per-atom blocks
    feat_ref, mu_ref, t_ref,
    # resident weights ([in, out] layout) / biases / coefs
    wq1_ref, bq1_ref, wq2_ref, bq2_ref,
    wt1_ref, cm1_ref, wt2_ref, cm2_ref, wt3_ref, cm3_ref,
    ws1_ref, bs1_ref,
    wo_s_ref, bo_ref, wo_x_ref, wo_y_ref, wo_z_ref,
    # fused lane-dense output slab
    out_ref,
):
    tn, F = feat_ref.shape

    def dot(x, w):
        return jnp.dot(x, w, preferred_element_type=jnp.float32)

    def recip(x):
        # EUP vrcp (approx) + one Newton step -> ~f32 accuracy, divide stays off the VALU.
        r = pl.reciprocal(x, approx=True)
        return r * (2.0 - x * r)

    def swish(x):
        # clamp keeps exp finite so the Newton-refined reciprocal never sees inf
        xs = jnp.maximum(x, -60.0)
        return x * recip(1.0 + jnp.exp(-xs))

    # ---- M0 = denseq(feat) : Dense+swish -> Dense -------------------------------------
    feat = feat_ref[...]
    m0 = dot(swish(dot(feat, wq1_ref[...]) + bq1_ref[...]), wq2_ref[...]) + bq2_ref[...]

    # ---- dense_T projections: one MXU dot per multipole order, fused over directions ---
    mu_flat = mu_ref[...].reshape(3 * tn, F)   # free: collapse leading dim into sublanes

    def project(wt_ref, cm_ref):
        mp = dot(mu_flat, wt_ref[...])                           # [3*tn, F]
        x, y, z = mp[0:tn], mp[tn:2 * tn], mp[2 * tn:3 * tn]     # sublane slices: free
        xe, ye, ze = x + EPS, y + EPS, z + EPS
        norm = jnp.sqrt(xe * xe + ye * ye + ze * ze)
        cm = cm_ref[...]
        inv = recip(cm * cm * norm + 1.0)
        return x * inv, y * inv, z * inv

    # ---- interaction-tensor columns (pre-symmetrized in the wrapper) -------------------
    t = t_ref[...]                                               # [tn, 37]

    def cb(i):                                                   # lane-broadcast col i -> [tn, F]
        return jnp.broadcast_to(t[:, i:i + 1], (tn, F))

    # dipole order first so m1 dies before the pair loop (smaller live set)
    m1 = project(wt1_ref, cm1_ref)
    t1b = [cb(_C_T1 + d) for d in range(3)]
    ms = cb(0) * m0 + t1b[0] * m1[0] + t1b[1] * m1[1] + t1b[2] * m1[2]
    mv = []
    for i in range(3):
        v = t1b[i] * m0
        for j in range(3):                                       # mv_i += sum_j T2[i,j] * M1_j
            v = v + cb(_C_T2F + 3 * i + j) * m1[j]
        mv.append(v)

    m2 = project(wt2_ref, cm2_ref)
    m3 = project(wt3_ref, cm3_ref)

    # ---- quadrupole / octupole: single pass over symmetric (j,k) pairs -----------------
    s = [None, None, None]
    for p, (j, k) in enumerate(_PAIRS):
        p2 = m2[j] * m2[k]
        p3 = m3[j] * m3[k]
        ms = ms + cb(_C_T2S + p) * p2                            # quadrupole -> ms
        for i in range(3):
            c = cb(_C_T3S + 3 * p + i)                           # symmetrized T3[i, j, k]
            mv[i] = mv[i] + c * p2                               # octupole -> mv
            s[i] = c * p3 if s[i] is None else s[i] + c * p3     # octupole -> ms (partial)
    ms = ms + m3[0] * s[0] + m3[1] * s[1] + m3[2] * s[2]

    # ---- output: one lane-dense slab assembled by column-embedded MXU dots -------------
    hidden = swish(dot(ms, ws1_ref[...]) + bs1_ref[...])
    out = dot(hidden, wo_s_ref[...]) + bo_ref[...]               # ms   -> cols 0:A
    out = out + dot(mv[0], wo_x_ref[...])                        # mv_x -> cols A:2A
    out = out + dot(mv[1], wo_y_ref[...])                        # mv_y -> cols 2A:3A
    out = out + dot(mv[2], wo_z_ref[...])                        # mv_z -> cols 3A:4A
    out_ref[...] = out.astype(out_ref.dtype)


def prepare_multipole_weights(params):
    """One-time weight preprocessing (hoisted out of the per-call path)."""
    F = params["wq1"].shape[0]
    A = params["ws2"].shape[0]
    out_w = ((max(4 * A, 128) + 127) // 128) * 128
    f32 = jnp.float32

    def row(v):
        return jnp.asarray(v, f32).reshape(1, -1)

    def embed(w, col0):                       # [A, F] -> [F, out_w] with cols col0:col0+A filled
        w_t = jnp.asarray(w, f32).T
        return jnp.zeros((F, out_w), f32).at[:, col0:col0 + A].set(w_t)

    weights = (
        jnp.asarray(params["wq1"], f32).T, row(params["bq1"]),
        jnp.asarray(params["wq2"], f32).T, row(params["bq2"]),
        jnp.asarray(params["wt1"], f32).T, row(params["cm1"]),
        jnp.asarray(params["wt2"], f32).T, row(params["cm2"]),
        jnp.asarray(params["wt3"], f32).T, row(params["cm3"]),
        jnp.asarray(params["ws1"], f32).T, row(params["bs1"]),
        embed(params["ws2"], 0),                                        # ms projection
        jnp.zeros((1, out_w), f32).at[0, 0:A].set(jnp.asarray(params["bs2"], f32)),
        embed(params["wv"], A),                                         # mv_x
        embed(params["wv"], 2 * A),                                     # mv_y
        embed(params["wv"], 3 * A),                                     # mv_z
    )
    return {"weights": weights, "F": F, "A": A, "out_w": out_w}


def _pack_interaction_tensors(g, N):
    """[N, 37] = T0 | T1 | T2 full | symmetrized T2 pairs | symmetrized T3, in kernel use order."""
    T0 = jnp.asarray(g["T0"], jnp.float32).reshape(N, 1)
    T1 = jnp.asarray(g["T1"], jnp.float32).reshape(N, 3)
    T2 = jnp.asarray(g["T2"], jnp.float32).reshape(N, 3, 3)
    T3 = jnp.asarray(g["T3"], jnp.float32).reshape(N, 3, 3, 3)
    t2s = jnp.stack(
        [T2[:, j, k] if j == k else T2[:, j, k] + T2[:, k, j] for (j, k) in _PAIRS], axis=1)
    t3s = jnp.stack(
        [(T3[:, i, j, k] if j == k else T3[:, i, j, k] + T3[:, i, k, j])
         for (j, k) in _PAIRS for i in range(3)], axis=1)
    return jnp.concatenate([T0, T1, T2.reshape(N, 9), t2s, t3s], axis=1)


def multipole_interaction_pallas(g, feat, mu, params_or_prep, *, tile_n=1024, interpret=False):
    """g: dict with T0 [N], T1 [N,3], T2 [N,3,3], T3 [N,3,3,3] (T4 presence implied).
    feat: [N, F].  mu: [3, N, F] (direction-major; PyTorch mu.permute(2,0,1)).
    Returns (ms [N, A], mv [3, N, A]) where mv[d] == PyTorch mv[:, :, d]."""
    prep = params_or_prep if "weights" in params_or_prep else prepare_multipole_weights(params_or_prep)
    weights, F, A, out_w = prep["weights"], prep["F"], prep["A"], prep["out_w"]

    N = feat.shape[0]
    feat = jnp.asarray(feat, jnp.float32)
    mu = jnp.asarray(mu, jnp.float32)
    tcat = _pack_interaction_tensors(g, N)

    # Tile: large enough to amortize per-step overhead, capped at ~N/4 so the grid keeps
    # several steps (v7x megacore sharding of the "parallel" axis), multiple of 8 sublanes.
    tn = min(int(tile_n), max(8, -(-N // 4)))
    tn = max(8, ((tn + 7) // 8) * 8)
    n_pad = ((N + tn - 1) // tn) * tn
    if n_pad != N:
        pad = n_pad - N
        feat = jnp.pad(feat, ((0, pad), (0, 0)))
        mu = jnp.pad(mu, ((0, 0), (0, pad), (0, 0)))
        tcat = jnp.pad(tcat, ((0, pad), (0, 0)))
    grid = (n_pad // tn,)

    in_specs = [
        pl.BlockSpec((tn, F), lambda i: (i, 0)),            # feat
        pl.BlockSpec((3, tn, F), lambda i: (0, i, 0)),      # mu (3 slabs / step)
        pl.BlockSpec((tn, _NT), lambda i: (i, 0)),          # packed interaction tensors
    ] + [pl.BlockSpec(w.shape, lambda i: (0, 0)) for w in weights]   # resident weights

    out_spec = pl.BlockSpec((tn, out_w), lambda i: (i, 0))

    # VMEM budget: double-buffered IO blocks + ~40 lane-padded [tn, F] temporaries.
    per_step_io = tn * 4 * (4 * F + 128 + out_w)
    vmem_limit = int(min(64 * 2 ** 20, max(16 * 2 ** 20, 2 * per_step_io + 40 * tn * 128 * 4)))

    out = pl.pallas_call(
        _multipole_kernel,
        out_shape=jax.ShapeDtypeStruct((n_pad, out_w), jnp.float32),
        grid=grid,
        in_specs=in_specs,
        out_specs=out_spec,
        compiler_params=pltpu.CompilerParams(
            dimension_semantics=("parallel",),
            vmem_limit_bytes=vmem_limit,
        ),
        interpret=interpret,
    )(feat, mu, tcat, *weights)

    ms = out[:N, 0:A]
    mv3 = jnp.stack([out[:N, (1 + d) * A:(2 + d) * A] for d in range(3)], axis=0)
    return ms, mv3


# ------------------------- pure-JAX reference (PyTorch layouts) -----------------------
def multipole_interaction_ref(g, feat, mu, params):
    """feat [N,F], mu [N,F,3] (PyTorch layout). Returns ms [N,A], mv [N,A,3]."""
    def swish(x):
        return x * jax.nn.sigmoid(x)

    def lin(x, w, b=None):
        y = jnp.dot(x, w.T, precision=jax.lax.Precision.HIGHEST)
        return y + b if b is not None else y

    M0 = lin(swish(lin(feat, params["wq1"], params["bq1"])), params["wq2"], params["bq2"])

    def proj(w, c):
        M = jnp.einsum("nfd,gf->ngd", mu, w, precision=jax.lax.Precision.HIGHEST)
        norm = jnp.linalg.norm(M + EPS, axis=-1)
        return M / ((c ** 2)[None] * norm + 1.0)[:, :, None]

    M1 = proj(params["wt1"], params["cm1"])
    M2 = proj(params["wt2"], params["cm2"])
    M3 = proj(params["wt3"], params["cm3"])

    T0, T1, T2, T3 = g["T0"], g["T1"], g["T2"], g["T3"]
    ms = jnp.sum(M1 * T1[:, None, :], axis=-1) + T0[:, None] * M0
    mv = T1[:, None, :] * M0[..., None]

    quad = M2[..., :, None] * M2[..., None, :]
    ms = ms + jnp.einsum("nfij,nij->nf", quad, T2)
    mv = mv + jnp.einsum("nij,nfj->nfi", T2, M1)

    octu = M3[..., :, None, None] * M3[..., None, :, None] * M3[..., None, None, :]
    ms = ms + jnp.einsum("nfijk,nijk->nf", octu, T3)
    mv = mv + jnp.einsum("nijk,nfjk->nfi", T3, quad)

    mv = jnp.einsum("nfi,af->nai", mv, params["wv"], precision=jax.lax.Precision.HIGHEST)
    ms = lin(swish(lin(ms, params["ws1"], params["bs1"])), params["ws2"], params["bs2"])
    return ms, mv


if __name__ == "__main__":
    N, F, A = 56, 32, 16     # atoms, dipole_features, n_atom_basis

    key = jax.random.PRNGKey(0)
    ks = jax.random.split(key, 20)

    def w(k, shape, s=0.2):
        return (s * jax.random.normal(k, shape)).astype(jnp.float32)

    params = {
        "wq1": w(ks[0], (F, F)), "bq1": w(ks[1], (F,), 0.05),
        "wq2": w(ks[2], (F, F)), "bq2": w(ks[3], (F,), 0.05),
        "wt1": w(ks[4], (F, F)), "wt2": w(ks[5], (F, F)), "wt3": w(ks[6], (F, F)),
        "cm1": jnp.ones((F,), jnp.float32),
        "cm2": jnp.ones((F,), jnp.float32),
        "cm3": jnp.ones((F,), jnp.float32),
        "ws1": w(ks[7], (F, F)), "bs1": w(ks[8], (F,), 0.05),
        "ws2": w(ks[9], (A, F)), "bs2": w(ks[10], (A,), 0.05),
        "wv":  w(ks[11], (A, F)),
    }

    feat = w(ks[12], (N, F), 0.5)
    mu3 = w(ks[13], (3, N, F), 0.5)           # kernel layout [direction, atom, feature]
    g = {
        "T0": w(ks[14], (N,), 0.5),
        "T1": w(ks[15], (N, 3), 0.5),
        "T2": w(ks[16], (N, 3, 3), 0.5),
        "T3": w(ks[17], (N, 3, 3, 3), 0.5),
        "T4": w(ks[18], (N, 3, 3, 3, 3), 0.5),  # only presence matters in the PyTorch forward
    }

    prep = prepare_multipole_weights(params)    # one-time weight prep, hoisted out of the call path
    ms, mv3 = multipole_interaction_pallas(g, feat, mu3, prep)
    jax.block_until_ready((ms, mv3))

    # reference uses PyTorch layouts: mu [N,F,3], mv [N,A,3]
    mu_pt = jnp.transpose(mu3, (1, 2, 0))
    ms_ref, mv_ref = multipole_interaction_ref(g, feat, mu_pt, params)
    mv3_ref = jnp.transpose(mv_ref, (2, 0, 1))

    np.testing.assert_allclose(np.asarray(ms), np.asarray(ms_ref), rtol=1e-3, atol=1e-4)
    np.testing.assert_allclose(np.asarray(mv3), np.asarray(mv3_ref), rtol=1e-3, atol=1e-4)

    print("KERNEL_OK")
</pallas_src>

<mosaic_0001>
module attributes {stable_mosaic.version = 11 : i64} {
  func.func @_multipole_kernel(%arg0: i32, %arg1: memref<16x32xf32, #tpu.memory_space<vmem>>, %arg2: memref<3x16x32xf32, #tpu.memory_space<vmem>>, %arg3: memref<16x37xf32, #tpu.memory_space<vmem>>, %arg4: memref<32x32xf32, #tpu.memory_space<vmem>>, %arg5: memref<1x32xf32, #tpu.memory_space<vmem>>, %arg6: memref<32x32xf32, #tpu.memory_space<vmem>>, %arg7: memref<1x32xf32, #tpu.memory_space<vmem>>, %arg8: memref<32x32xf32, #tpu.memory_space<vmem>>, %arg9: memref<1x32xf32, #tpu.memory_space<vmem>>, %arg10: memref<32x32xf32, #tpu.memory_space<vmem>>, %arg11: memref<1x32xf32, #tpu.memory_space<vmem>>, %arg12: memref<32x32xf32, #tpu.memory_space<vmem>>, %arg13: memref<1x32xf32, #tpu.memory_space<vmem>>, %arg14: memref<32x32xf32, #tpu.memory_space<vmem>>, %arg15: memref<1x32xf32, #tpu.memory_space<vmem>>, %arg16: memref<32x128xf32, #tpu.memory_space<vmem>>, %arg17: memref<1x128xf32, #tpu.memory_space<vmem>>, %arg18: memref<32x128xf32, #tpu.memory_space<vmem>>, %arg19: memref<32x128xf32, #tpu.memory_space<vmem>>, %arg20: memref<32x128xf32, #tpu.memory_space<vmem>>, %arg21: memref<16x128xf32, #tpu.memory_space<vmem>>) attributes {dimension_semantics = [#tpu.dimension_semantics<parallel>], iteration_bounds = array<i64: 4>, scalar_prefetch = 0 : i64, scratch_operands = 0 : i64, tpu.core_type = #tpu.core_type<tc>, window_params = [{transform_indices = @transform_0, window_bounds = array<i64: 16, 32>}, {transform_indices = @transform_1, window_bounds = array<i64: 3, 16, 32>}, {transform_indices = @transform_2, window_bounds = array<i64: 16, 37>}, {pipeline_mode = #tpu.pipeline_mode<synchronous>, transform_indices = @transform_3, window_bounds = array<i64: 32, 32>}, {pipeline_mode = #tpu.pipeline_mode<synchronous>, transform_indices = @transform_4, window_bounds = array<i64: 1, 32>}, {pipeline_mode = #tpu.pipeline_mode<synchronous>, transform_indices = @transform_5, window_bounds = array<i64: 32, 32>}, {pipeline_mode = #tpu.pipeline_mode<synchronous>, transform_indices = @transform_6, window_bounds = array<i64: 1, 32>}, {pipeline_mode = #tpu.pipeline_mode<synchronous>, transform_indices = @transform_7, window_bounds = array<i64: 32, 32>}, {pipeline_mode = #tpu.pipeline_mode<synchronous>, transform_indices = @transform_8, window_bounds = array<i64: 1, 32>}, {pipeline_mode = #tpu.pipeline_mode<synchronous>, transform_indices = @transform_9, window_bounds = array<i64: 32, 32>}, {pipeline_mode = #tpu.pipeline_mode<synchronous>, transform_indices = @transform_10, window_bounds = array<i64: 1, 32>}, {pipeline_mode = #tpu.pipeline_mode<synchronous>, transform_indices = @transform_11, window_bounds = array<i64: 32, 32>}, {pipeline_mode = #tpu.pipeline_mode<synchronous>, transform_indices = @transform_12, window_bounds = array<i64: 1, 32>}, {pipeline_mode = #tpu.pipeline_mode<synchronous>, transform_indices = @transform_13, window_bounds = array<i64: 32, 32>}, {pipeline_mode = #tpu.pipeline_mode<synchronous>, transform_indices = @transform_14, window_bounds = array<i64: 1, 32>}, {pipeline_mode = #tpu.pipeline_mode<synchronous>, transform_indices = @transform_15, window_bounds = array<i64: 32, 128>}, {pipeline_mode = #tpu.pipeline_mode<synchronous>, transform_indices = @transform_16, window_bounds = array<i64: 1, 128>}, {pipeline_mode = #tpu.pipeline_mode<synchronous>, transform_indices = @transform_17, window_bounds = array<i64: 32, 128>}, {pipeline_mode = #tpu.pipeline_mode<synchronous>, transform_indices = @transform_18, window_bounds = array<i64: 32, 128>}, {pipeline_mode = #tpu.pipeline_mode<synchronous>, transform_indices = @transform_19, window_bounds = array<i64: 32, 128>}, {transform_indices = @transform_20, window_bounds = array<i64: 16, 128>}]} {
    %c0 = arith.constant 0 : index
    %c0_0 = arith.constant 0 : index
    %0 = vector.load %arg1[%c0, %c0_0] : memref<16x32xf32, #tpu.memory_space<vmem>>, vector<16x32xf32>
    %c0_1 = arith.constant 0 : index
    %c0_2 = arith.constant 0 : index
    %1 = vector.load %arg4[%c0_1, %c0_2] : memref<32x32xf32, #tpu.memory_space<vmem>>, vector<32x32xf32>
    %cst = arith.constant dense<0.000000e+00> : vector<16x32xf32>
    %2 = tpu.matmul %0, %1, %cst {dimension_numbers = #tpu.dot_dimension_numbers<[1], [0], [0], [1], [0, 0, 1, 1], [], []>} : vector<16x32xf32>, vector<32x32xf32>, vector<16x32xf32> -> vector<16x32xf32>
    %c0_3 = arith.constant 0 : index
    %c0_4 = arith.constant 0 : index
    %3 = vector.load %arg5[%c0_3, %c0_4] : memref<1x32xf32, #tpu.memory_space<vmem>>, vector<1x32xf32>
    %4 = vector.broadcast %3 : vector<1x32xf32> to vector<16x32xf32>
    %5 = arith.addf %2, %4 : vector<16x32xf32>
    %cst_5 = arith.constant -6.000000e+01 : f32
    %6 = vector.broadcast %cst_5 : f32 to vector<16x32xf32>
    %7 = arith.maximumf %5, %6 : vector<16x32xf32>
    %cst_6 = arith.constant 0.000000e+00 : f32
    %8 = vector.broadcast %cst_6 : f32 to vector<16x32xf32>
    %9 = arith.subf %8, %7 : vector<16x32xf32>
    %10 = math.exp %9 : vector<16x32xf32>
    %cst_7 = arith.constant 1.000000e+00 : f32
    %11 = vector.broadcast %cst_7 : f32 to vector<16x32xf32>
    %12 = arith.addf %11, %10 : vector<16x32xf32>
    %13 = tpu.reciprocal %12 {approx = true} : vector<16x32xf32> -> vector<16x32xf32>
    %14 = arith.mulf %12, %13 : vector<16x32xf32>
    %cst_8 = arith.constant 2.000000e+00 : f32
    %15 = vector.broadcast %cst_8 : f32 to vector<16x32xf32>
    %16 = arith.subf %15, %14 : vector<16x32xf32>
    %17 = arith.mulf %13, %16 : vector<16x32xf32>
    %18 = arith.mulf %5, %17 : vector<16x32xf32>
    %c0_9 = arith.constant 0 : index
    %c0_10 = arith.constant 0 : index
    %19 = vector.load %arg6[%c0_9, %c0_10] : memref<32x32xf32, #tpu.memory_space<vmem>>, vector<32x32xf32>
    %cst_11 = arith.constant dense<0.000000e+00> : vector<16x32xf32>
    %20 = tpu.matmul %18, %19, %cst_11 {dimension_numbers = #tpu.dot_dimension_numbers<[1], [0], [0], [1], [0, 0, 1, 1], [], []>} : vector<16x32xf32>, vector<32x32xf32>, vector<16x32xf32> -> vector<16x32xf32>
    %c0_12 = arith.constant 0 : index
    %c0_13 = arith.constant 0 : index
    %21 = vector.load %arg7[%c0_12, %c0_13] : memref<1x32xf32, #tpu.memory_space<vmem>>, vector<1x32xf32>
    %22 = vector.broadcast %21 : vector<1x32xf32> to vector<16x32xf32>
    %23 = arith.addf %20, %22 : vector<16x32xf32>
    %c0_14 = arith.constant 0 : index
    %c0_15 = arith.constant 0 : index
    %c0_16 = arith.constant 0 : index
    %24 = vector.load %arg2[%c0_14, %c0_15, %c0_16] : memref<3x16x32xf32, #tpu.memory_space<vmem>>, vector<3x16x32xf32>
    %25 = vector.shape_cast %24 : vector<3x16x32xf32> to vector<48x32xf32>
    %c0_17 = arith.constant 0 : index
    %c0_18 = arith.constant 0 : index
    %26 = vector.load %arg3[%c0_17, %c0_18] : memref<16x37xf32, #tpu.memory_space<vmem>>, vector<16x37xf32>
    %c0_19 = arith.constant 0 : index
    %c0_20 = arith.constant 0 : index
    %27 = vector.load %arg8[%c0_19, %c0_20] : memref<32x32xf32, #tpu.memory_space<vmem>>, vector<32x32xf32>
    %cst_21 = arith.constant dense<0.000000e+00> : vector<48x32xf32>
    %28 = tpu.matmul %25, %27, %cst_21 {dimension_numbers = #tpu.dot_dimension_numbers<[1], [0], [0], [1], [0, 0, 1, 1], [], []>} : vector<48x32xf32>, vector<32x32xf32>, vector<48x32xf32> -> vector<48x32xf32>
    %29 = vector.extract_strided_slice %28 {offsets = [0, 0], sizes = [16, 32], strides = [1, 1]} : vector<48x32xf32> to vector<16x32xf32>
    %30 = vector.extract_strided_slice %28 {offsets = [16, 0], sizes = [16, 32], strides = [1, 1]} : vector<48x32xf32> to vector<16x32xf32>
    %31 = vector.extract_strided_slice %28 {offsets = [32, 0], sizes = [16, 32], strides = [1, 1]} : vector<48x32xf32> to vector<16x32xf32>
    %cst_22 = arith.constant 1.000000e-07 : f32
    %32 = vector.broadcast %cst_22 : f32 to vector<16x32xf32>
    %33 = arith.addf %29, %32 : vector<16x32xf32>
    %cst_23 = arith.constant 1.000000e-07 : f32
    %34 = vector.broadcast %cst_23 : f32 to vector<16x32xf32>
    %35 = arith.addf %30, %34 : vector<16x32xf32>
    %cst_24 = arith.constant 1.000000e-07 : f32
    %36 = vector.broadcast %cst_24 : f32 to vector<16x32xf32>
    %37 = arith.addf %31, %36 : vector<16x32xf32>
    %38 = arith.mulf %33, %33 : vector<16x32xf32>
    %39 = arith.mulf %35, %35 : vector<16x32xf32>
    %40 = arith.addf %38, %39 : vector<16x32xf32>
    %41 = arith.mulf %37, %37 : vector<16x32xf32>
    %42 = arith.addf %40, %41 : vector<16x32xf32>
    %43 = math.sqrt %42 : vector<16x32xf32>
    %c0_25 = arith.constant 0 : index
    %c0_26 = arith.constant 0 : index
    %44 = vector.load %arg9[%c0_25, %c0_26] : memref<1x32xf32, #tpu.memory_space<vmem>>, vector<1x32xf32>
    %45 = arith.mulf %44, %44 : vector<1x32xf32>
    %46 = vector.broadcast %45 : vector<1x32xf32> to vector<16x32xf32>
    %47 = arith.mulf %46, %43 : vector<16x32xf32>
    %cst_27 = arith.constant 1.000000e+00 : f32
    %48 = vector.broadcast %cst_27 : f32 to vector<16x32xf32>
    %49 = arith.addf %47, %48 : vector<16x32xf32>
    %50 = tpu.reciprocal %49 {approx = true} : vector<16x32xf32> -> vector<16x32xf32>
    %51 = arith.mulf %49, %50 : vector<16x32xf32>
    %cst_28 = arith.constant 2.000000e+00 : f32
    %52 = vector.broadcast %cst_28 : f32 to vector<16x32xf32>
    %53 = arith.subf %52, %51 : vector<16x32xf32>
    %54 = arith.mulf %50, %53 : vector<16x32xf32>
    %55 = arith.mulf %29, %54 : vector<16x32xf32>
    %56 = arith.mulf %30, %54 : vector<16x32xf32>
    %57 = arith.mulf %31, %54 : vector<16x32xf32>
    %58 = vector.extract_strided_slice %26 {offsets = [0, 1], sizes = [16, 1], strides = [1, 1]} : vector<16x37xf32> to vector<16x1xf32>
    %59 = vector.shape_cast %58 : vector<16x1xf32> to vector<16x1xf32>
    %60 = vector.broadcast %59 : vector<16x1xf32> to vector<16x32xf32>
    %61 = vector.extract_strided_slice %26 {offsets = [0, 2], sizes = [16, 1], strides = [1, 1]} : vector<16x37xf32> to vector<16x1xf32>
    %62 = vector.shape_cast %61 : vector<16x1xf32> to vector<16x1xf32>
    %63 = vector.broadcast %62 : vector<16x1xf32> to vector<16x32xf32>
    %64 = vector.extract_strided_slice %26 {offsets = [0, 3], sizes = [16, 1], strides = [1, 1]} : vector<16x37xf32> to vector<16x1xf32>
    %65 = vector.shape_cast %64 : vector<16x1xf32> to vector<16x1xf32>
    %66 = vector.broadcast %65 : vector<16x1xf32> to vector<16x32xf32>
    %67 = vector.extract_strided_slice %26 {offsets = [0, 0], sizes = [16, 1], strides = [1, 1]} : vector<16x37xf32> to vector<16x1xf32>
    %68 = vector.shape_cast %67 : vector<16x1xf32> to vector<16x1xf32>
    %69 = vector.broadcast %68 : vector<16x1xf32> to vector<16x32xf32>
    %70 = arith.mulf %69, %23 : vector<16x32xf32>
    %71 = arith.mulf %60, %55 : vector<16x32xf32>
    %72 = arith.addf %70, %71 : vector<16x32xf32>
    %73 = arith.mulf %63, %56 : vector<16x32xf32>
    %74 = arith.addf %72, %73 : vector<16x32xf32>
    %75 = arith.mulf %66, %57 : vector<16x32xf32>
    %76 = arith.addf %74, %75 : vector<16x32xf32>
    %77 = arith.mulf %60, %23 : vector<16x32xf32>
    %78 = vector.extract_strided_slice %26 {offsets = [0, 4], sizes = [16, 1], strides = [1, 1]} : vector<16x37xf32> to vector<16x1xf32>
    %79 = vector.shape_cast %78 : vector<16x1xf32> to vector<16x1xf32>
    %80 = vector.broadcast %79 : vector<16x1xf32> to vector<16x32xf32>
    %81 = arith.mulf %80, %55 : vector<16x32xf32>
    %82 = arith.addf %77, %81 : vector<16x32xf32>
    %83 = vector.extract_strided_slice %26 {offsets = [0, 5], sizes = [16, 1], strides = [1, 1]} : vector<16x37xf32> to vector<16x1xf32>
    %84 = vector.shape_cast %83 : vector<16x1xf32> to vector<16x1xf32>
    %85 = vector.broadcast %84 : vector<16x1xf32> to vector<16x32xf32>
    %86 = arith.mulf %85, %56 : vector<16x32xf32>
    %87 = arith.addf %82, %86 : vector<16x32xf32>
    %88 = vector.extract_strided_slice %26 {offsets = [0, 6], sizes = [16, 1], strides = [1, 1]} : vector<16x37xf32> to vector<16x1xf32>
    %89 = vector.shape_cast %88 : vector<16x1xf32> to vector<16x1xf32>
    %90 = vector.broadcast %89 : vector<16x1xf32> to vector<16x32xf32>
    %91 = arith.mulf %90, %57 : vector<16x32xf32>
    %92 = arith.addf %87, %91 : vector<16x32xf32>
    %93 = arith.mulf %63, %23 : vector<16x32xf32>
    %94 = vector.extract_strided_slice %26 {offsets = [0, 7], sizes = [16, 1], strides = [1, 1]} : vector<16x37xf32> to vector<16x1xf32>
    %95 = vector.shape_cast %94 : vector<16x1xf32> to vector<16x1xf32>
    %96 = vector.broadcast %95 : vector<16x1xf32> to vector<16x32xf32>
    %97 = arith.mulf %96, %55 : vector<16x32xf32>
    %98 = arith.addf %93, %97 : vector<16x32xf32>
    %99 = vector.extract_strided_slice %26 {offsets = [0, 8], sizes = [16, 1], strides = [1, 1]} : vector<16x37xf32> to vector<16x1xf32>
    %100 = vector.shape_cast %99 : vector<16x1xf32> to vector<16x1xf32>
    %101 = vector.broadcast %100 : vector<16x1xf32> to vector<16x32xf32>
    %102 = arith.mulf %101, %56 : vector<16x32xf32>
    %103 = arith.addf %98, %102 : vector<16x32xf32>
    %104 = vector.extract_strided_slice %26 {offsets = [0, 9], sizes = [16, 1], strides = [1, 1]} : vector<16x37xf32> to vector<16x1xf32>
    %105 = vector.shape_cast %104 : vector<16x1xf32> to vector<16x1xf32>
    %106 = vector.broadcast %105 : vector<16x1xf32> to vector<16x32xf32>
    %107 = arith.mulf %106, %57 : vector<16x32xf32>
    %108 = arith.addf %103, %107 : vector<16x32xf32>
    %109 = arith.mulf %66, %23 : vector<16x32xf32>
    %110 = vector.extract_strided_slice %26 {offsets = [0, 10], sizes = [16, 1], strides = [1, 1]} : vector<16x37xf32> to vector<16x1xf32>
    %111 = vector.shape_cast %110 : vector<16x1xf32> to vector<16x1xf32>
    %112 = vector.broadcast %111 : vector<16x1xf32> to vector<16x32xf32>
    %113 = arith.mulf %112, %55 : vector<16x32xf32>
    %114 = arith.addf %109, %113 : vector<16x32xf32>
    %115 = vector.extract_strided_slice %26 {offsets = [0, 11], sizes = [16, 1], strides = [1, 1]} : vector<16x37xf32> to vector<16x1xf32>
    %116 = vector.shape_cast %115 : vector<16x1xf32> to vector<16x1xf32>
    %117 = vector.broadcast %116 : vector<16x1xf32> to vector<16x32xf32>
    %118 = arith.mulf %117, %56 : vector<16x32xf32>
    %119 = arith.addf %114, %118 : vector<16x32xf32>
    %120 = vector.extract_strided_slice %26 {offsets = [0, 12], sizes = [16, 1], strides = [1, 1]} : vector<16x37xf32> to vector<16x1xf32>
    %121 = vector.shape_cast %120 : vector<16x1xf32> to vector<16x1xf32>
    %122 = vector.broadcast %121 : vector<16x1xf32> to vector<16x32xf32>
    %123 = arith.mulf %122, %57 : vector<16x32xf32>
    %124 = arith.addf %119, %123 : vector<16x32xf32>
    %c0_29 = arith.constant 0 : index
    %c0_30 = arith.constant 0 : index
    %125 = vector.load %arg10[%c0_29, %c0_30] : memref<32x32xf32, #tpu.memory_space<vmem>>, vector<32x32xf32>
    %cst_31 = arith.constant dense<0.000000e+00> : vector<48x32xf32>
    %126 = tpu.matmul %25, %125, %cst_31 {dimension_numbers = #tpu.dot_dimension_numbers<[1], [0], [0], [1], [0, 0, 1, 1], [], []>} : vector<48x32xf32>, vector<32x32xf32>, vector<48x32xf32> -> vector<48x32xf32>
    %127 = vector.extract_strided_slice %126 {offsets = [0, 0], sizes = [16, 32], strides = [1, 1]} : vector<48x32xf32> to vector<16x32xf32>
    %128 = vector.extract_strided_slice %126 {offsets = [16, 0], sizes = [16, 32], strides = [1, 1]} : vector<48x32xf32> to vector<16x32xf32>
    %129 = vector.extract_strided_slice %126 {offsets = [32, 0], sizes = [16, 32], strides = [1, 1]} : vector<48x32xf32> to vector<16x32xf32>
    %cst_32 = arith.constant 1.000000e-07 : f32
    %130 = vector.broadcast %cst_32 : f32 to vector<16x32xf32>
    %131 = arith.addf %127, %130 : vector<16x32xf32>
    %cst_33 = arith.constant 1.000000e-07 : f32
    %132 = vector.broadcast %cst_33 : f32 to vector<16x32xf32>
    %133 = arith.addf %128, %132 : vector<16x32xf32>
    %cst_34 = arith.constant 1.000000e-07 : f32
    %134 = vector.broadcast %cst_34 : f32 to vector<16x32xf32>
    %135 = arith.addf %129, %134 : vector<16x32xf32>
    %136 = arith.mulf %131, %131 : vector<16x32xf32>
    %137 = arith.mulf %133, %133 : vector<16x32xf32>
    %138 = arith.addf %136, %137 : vector<16x32xf32>
    %139 = arith.mulf %135, %135 : vector<16x32xf32>
    %140 = arith.addf %138, %139 : vector<16x32xf32>
    %141 = math.sqrt %140 : vector<16x32xf32>
    %c0_35 = arith.constant 0 : index
    %c0_36 = arith.constant 0 : index
    %142 = vector.load %arg11[%c0_35, %c0_36] : memref<1x32xf32, #tpu.memory_space<vmem>>, vector<1x32xf32>
    %143 = arith.mulf %142, %142 : vector<1x32xf32>
    %144 = vector.broadcast %143 : vector<1x32xf32> to vector<16x32xf32>
    %145 = arith.mulf %144, %141 : vector<16x32xf32>
    %cst_37 = arith.constant 1.000000e+00 : f32
    %146 = vector.broadcast %cst_37 : f32 to vector<16x32xf32>
    %147 = arith.addf %145, %146 : vector<16x32xf32>
    %148 = tpu.reciprocal %147 {approx = true} : vector<16x32xf32> -> vector<16x32xf32>
    %149 = arith.mulf %147, %148 : vector<16x32xf32>
    %cst_38 = arith.constant 2.000000e+00 : f32
    %150 = vector.broadcast %cst_38 : f32 to vector<16x32xf32>
    %151 = arith.subf %150, %149 : vector<16x32xf32>
    %152 = arith.mulf %148, %151 : vector<16x32xf32>
    %153 = arith.mulf %127, %152 : vector<16x32xf32>
    %154 = arith.mulf %128, %152 : vector<16x32xf32>
    %155 = arith.mulf %129, %152 : vector<16x32xf32>
    %c0_39 = arith.constant 0 : index
    %c0_40 = arith.constant 0 : index
    %156 = vector.load %arg12[%c0_39, %c0_40] : memref<32x32xf32, #tpu.memory_space<vmem>>, vector<32x32xf32>
    %cst_41 = arith.constant dense<0.000000e+00> : vector<48x32xf32>
    %157 = tpu.matmul %25, %156, %cst_41 {dimension_numbers = #tpu.dot_dimension_numbers<[1], [0], [0], [1], [0, 0, 1, 1], [], []>} : vector<48x32xf32>, vector<32x32xf32>, vector<48x32xf32> -> vector<48x32xf32>
    %158 = vector.extract_strided_slice %157 {offsets = [0, 0], sizes = [16, 32], strides = [1, 1]} : vector<48x32xf32> to vector<16x32xf32>
    %159 = vector.extract_strided_slice %157 {offsets = [16, 0], sizes = [16, 32], strides = [1, 1]} : vector<48x32xf32> to vector<16x32xf32>
    %160 = vector.extract_strided_slice %157 {offsets = [32, 0], sizes = [16, 32], strides = [1, 1]} : vector<48x32xf32> to vector<16x32xf32>
    %cst_42 = arith.constant 1.000000e-07 : f32
    %161 = vector.broadcast %cst_42 : f32 to vector<16x32xf32>
    %162 = arith.addf %158, %161 : vector<16x32xf32>
    %cst_43 = arith.constant 1.000000e-07 : f32
    %163 = vector.broadcast %cst_43 : f32 to vector<16x32xf32>
    %164 = arith.addf %159, %163 : vector<16x32xf32>
    %cst_44 = arith.constant 1.000000e-07 : f32
    %165 = vector.broadcast %cst_44 : f32 to vector<16x32xf32>
    %166 = arith.addf %160, %165 : vector<16x32xf32>
    %167 = arith.mulf %162, %162 : vector<16x32xf32>
    %168 = arith.mulf %164, %164 : vector<16x32xf32>
    %169 = arith.addf %167, %168 : vector<16x32xf32>
    %170 = arith.mulf %166, %166 : vector<16x32xf32>
    %171 = arith.addf %169, %170 : vector<16x32xf32>
    %172 = math.sqrt %171 : vector<16x32xf32>
    %c0_45 = arith.constant 0 : index
    %c0_46 = arith.constant 0 : index
    %173 = vector.load %arg13[%c0_45, %c0_46] : memref<1x32xf32, #tpu.memory_space<vmem>>, vector<1x32xf32>
    %174 = arith.mulf %173, %173 : vector<1x32xf32>
    %175 = vector.broadcast %174 : vector<1x32xf32> to vector<16x32xf32>
    %176 = arith.mulf %175, %172 : vector<16x32xf32>
    %cst_47 = arith.constant 1.000000e+00 : f32
    %177 = vector.broadcast %cst_47 : f32 to vector<16x32xf32>
    %178 = arith.addf %176, %177 : vector<16x32xf32>
    %179 = tpu.reciprocal %178 {approx = true} : vector<16x32xf32> -> vector<16x32xf32>
    %180 = arith.mulf %178, %179 : vector<16x32xf32>
    %cst_48 = arith.constant 2.000000e+00 : f32
    %181 = vector.broadcast %cst_48 : f32 to vector<16x32xf32>
    %182 = arith.subf %181, %180 : vector<16x32xf32>
    %183 = arith.mulf %179, %182 : vector<16x32xf32>
    %184 = arith.mulf %158, %183 : vector<16x32xf32>
    %185 = arith.mulf %159, %183 : vector<16x32xf32>
    %186 = arith.mulf %160, %183 : vector<16x32xf32>
    %187 = arith.mulf %153, %153 : vector<16x32xf32>
    %188 = arith.mulf %184, %184 : vector<16x32xf32>
    %189 = vector.extract_strided_slice %26 {offsets = [0, 13], sizes = [16, 1], strides = [1, 1]} : vector<16x37xf32> to vector<16x1xf32>
    %190 = vector.shape_cast %189 : vector<16x1xf32> to vector<16x1xf32>
    %191 = vector.broadcast %190 : vector<16x1xf32> to vector<16x32xf32>
    %192 = arith.mulf %191, %187 : vector<16x32xf32>
    %193 = arith.addf %76, %192 : vector<16x32xf32>
    %194 = vector.extract_strided_slice %26 {offsets = [0, 19], sizes = [16, 1], strides = [1, 1]} : vector<16x37xf32> to vector<16x1xf32>
    %195 = vector.shape_cast %194 : vector<16x1xf32> to vector<16x1xf32>
    %196 = vector.broadcast %195 : vector<16x1xf32> to vector<16x32xf32>
    %197 = arith.mulf %196, %187 : vector<16x32xf32>
    %198 = arith.addf %92, %197 : vector<16x32xf32>
    %199 = arith.mulf %196, %188 : vector<16x32xf32>
    %200 = vector.extract_strided_slice %26 {offsets = [0, 20], sizes = [16, 1], strides = [1, 1]} : vector<16x37xf32> to vector<16x1xf32>
    %201 = vector.shape_cast %200 : vector<16x1xf32> to vector<16x1xf32>
    %202 = vector.broadcast %201 : vector<16x1xf32> to vector<16x32xf32>
    %203 = arith.mulf %202, %187 : vector<16x32xf32>
    %204 = arith.addf %108, %203 : vector<16x32xf32>
    %205 = arith.mulf %202, %188 : vector<16x32xf32>
    %206 = vector.extract_strided_slice %26 {offsets = [0, 21], sizes = [16, 1], strides = [1, 1]} : vector<16x37xf32> to vector<16x1xf32>
    %207 = vector.shape_cast %206 : vector<16x1xf32> to vector<16x1xf32>
    %208 = vector.broadcast %207 : vector<16x1xf32> to vector<16x32xf32>
    %209 = arith.mulf %208, %187 : vector<16x32xf32>
    %210 = arith.addf %124, %209 : vector<16x32xf32>
    %211 = arith.mulf %208, %188 : vector<16x32xf32>
    %212 = arith.mulf %153, %154 : vector<16x32xf32>
    %213 = arith.mulf %184, %185 : vector<16x32xf32>
    %214 = vector.extract_strided_slice %26 {offsets = [0, 14], sizes = [16, 1], strides = [1, 1]} : vector<16x37xf32> to vector<16x1xf32>
    %215 = vector.shape_cast %214 : vector<16x1xf32> to vector<16x1xf32>
    %216 = vector.broadcast %215 : vector<16x1xf32> to vector<16x32xf32>
    %217 = arith.mulf %216, %212 : vector<16x32xf32>
    %218 = arith.addf %193, %217 : vector<16x32xf32>
    %219 = vector.extract_strided_slice %26 {offsets = [0, 22], sizes = [16, 1], strides = [1, 1]} : vector<16x37xf32> to vector<16x1xf32>
    %220 = vector.shape_cast %219 : vector<16x1xf32> to vector<16x1xf32>
    %221 = vector.broadcast %220 : vector<16x1xf32> to vector<16x32xf32>
    %222 = arith.mulf %221, %212 : vector<16x32xf32>
    %223 = arith.addf %198, %222 : vector<16x32xf32>
    %224 = arith.mulf %221, %213 : vector<16x32xf32>
    %225 = arith.addf %199, %224 : vector<16x32xf32>
    %226 = vector.extract_strided_slice %26 {offsets = [0, 23], sizes = [16, 1], strides = [1, 1]} : vector<16x37xf32> to vector<16x1xf32>
    %227 = vector.shape_cast %226 : vector<16x1xf32> to vector<16x1xf32>
    %228 = vector.broadcast %227 : vector<16x1xf32> to vector<16x32xf32>
    %229 = arith.mulf %228, %212 : vector<16x32xf32>
    %230 = arith.addf %204, %229 : vector<16x32xf32>
    %231 = arith.mulf %228, %213 : vector<16x32xf32>
    %232 = arith.addf %205, %231 : vector<16x32xf32>
    %233 = vector.extract_strided_slice %26 {offsets = [0, 24], sizes = [16, 1], strides = [1, 1]} : vector<16x37xf32> to vector<16x1xf32>
    %234 = vector.shape_cast %233 : vector<16x1xf32> to vector<16x1xf32>
    %235 = vector.broadcast %234 : vector<16x1xf32> to vector<16x32xf32>
    %236 = arith.mulf %235, %212 : vector<16x32xf32>
    %237 = arith.addf %210, %236 : vector<16x32xf32>
    %238 = arith.mulf %235, %213 : vector<16x32xf32>
    %239 = arith.addf %211, %238 : vector<16x32xf32>
    %240 = arith.mulf %153, %155 : vector<16x32xf32>
    %241 = arith.mulf %184, %186 : vector<16x32xf32>
    %242 = vector.extract_strided_slice %26 {offsets = [0, 15], sizes = [16, 1], strides = [1, 1]} : vector<16x37xf32> to vector<16x1xf32>
    %243 = vector.shape_cast %242 : vector<16x1xf32> to vector<16x1xf32>
    %244 = vector.broadcast %243 : vector<16x1xf32> to vector<16x32xf32>
    %245 = arith.mulf %244, %240 : vector<16x32xf32>
    %246 = arith.addf %218, %245 : vector<16x32xf32>
    %247 = vector.extract_strided_slice %26 {offsets = [0, 25], sizes = [16, 1], strides = [1, 1]} : vector<16x37xf32> to vector<16x1xf32>
    %248 = vector.shape_cast %247 : vector<16x1xf32> to vector<16x1xf32>
    %249 = vector.broadcast %248 : vector<16x1xf32> to vector<16x32xf32>
    %250 = arith.mulf %249, %240 : vector<16x32xf32>
    %251 = arith.addf %223, %250 : vector<16x32xf32>
    %252 = arith.mulf %249, %241 : vector<16x32xf32>
    %253 = arith.addf %225, %252 : vector<16x32xf32>
    %254 = vector.extract_strided_slice %26 {offsets = [0, 26], sizes = [16, 1], strides = [1, 1]} : vector<16x37xf32> to vector<16x1xf32>
    %255 = vector.shape_cast %254 : vector<16x1xf32> to vector<16x1xf32>
    %256 = vector.broadcast %255 : vector<16x1xf32> to vector<16x32xf32>
    %257 = arith.mulf %256, %240 : vector<16x32xf32>
    %258 = arith.addf %230, %257 : vector<16x32xf32>
    %259 = arith.mulf %256, %241 : vector<16x32xf32>
    %260 = arith.addf %232, %259 : vector<16x32xf32>
    %261 = vector.extract_strided_slice %26 {offsets = [0, 27], sizes = [16, 1], strides = [1, 1]} : vector<16x37xf32> to vector<16x1xf32>
    %262 = vector.shape_cast %261 : vector<16x1xf32> to vector<16x1xf32>
    %263 = vector.broadcast %262 : vector<16x1xf32> to vector<16x32xf32>
    %264 = arith.mulf %263, %240 : vector<16x32xf32>
    %265 = arith.addf %237, %264 : vector<16x32xf32>
    %266 = arith.mulf %263, %241 : vector<16x32xf32>
    %267 = arith.addf %239, %266 : vector<16x32xf32>
    %268 = arith.mulf %154, %154 : vector<16x32xf32>
    %269 = arith.mulf %185, %185 : vector<16x32xf32>
    %270 = vector.extract_strided_slice %26 {offsets = [0, 16], sizes = [16, 1], strides = [1, 1]} : vector<16x37xf32> to vector<16x1xf32>
    %271 = vector.shape_cast %270 : vector<16x1xf32> to vector<16x1xf32>
    %272 = vector.broadcast %271 : vector<16x1xf32> to vector<16x32xf32>
    %273 = arith.mulf %272, %268 : vector<16x32xf32>
    %274 = arith.addf %246, %273 : vector<16x32xf32>
    %275 = vector.extract_strided_slice %26 {offsets = [0, 28], sizes = [16, 1], strides = [1, 1]} : vector<16x37xf32> to vector<16x1xf32>
    %276 = vector.shape_cast %275 : vector<16x1xf32> to vector<16x1xf32>
    %277 = vector.broadcast %276 : vector<16x1xf32> to vector<16x32xf32>
    %278 = arith.mulf %277, %268 : vector<16x32xf32>
    %279 = arith.addf %251, %278 : vector<16x32xf32>
    %280 = arith.mulf %277, %269 : vector<16x32xf32>
    %281 = arith.addf %253, %280 : vector<16x32xf32>
    %282 = vector.extract_strided_slice %26 {offsets = [0, 29], sizes = [16, 1], strides = [1, 1]} : vector<16x37xf32> to vector<16x1xf32>
    %283 = vector.shape_cast %282 : vector<16x1xf32> to vector<16x1xf32>
    %284 = vector.broadcast %283 : vector<16x1xf32> to vector<16x32xf32>
    %285 = arith.mulf %284, %268 : vector<16x32xf32>
    %286 = arith.addf %258, %285 : vector<16x32xf32>
    %287 = arith.mulf %284, %269 : vector<16x32xf32>
    %288 = arith.addf %260, %287 : vector<16x32xf32>
    %289 = vector.extract_strided_slice %26 {offsets = [0, 30], sizes = [16, 1], strides = [1, 1]} : vector<16x37xf32> to vector<16x1xf32>
    %290 = vector.shape_cast %289 : vector<16x1xf32> to vector<16x1xf32>
    %291 = vector.broadcast %290 : vector<16x1xf32> to vector<16x32xf32>
    %292 = arith.mulf %291, %268 : vector<16x32xf32>
    %293 = arith.addf %265, %292 : vector<16x32xf32>
    %294 = arith.mulf %291, %269 : vector<16x32xf32>
    %295 = arith.addf %267, %294 : vector<16x32xf32>
    %296 = arith.mulf %154, %155 : vector<16x32xf32>
    %297 = arith.mulf %185, %186 : vector<16x32xf32>
    %298 = vector.extract_strided_slice %26 {offsets = [0, 17], sizes = [16, 1], strides = [1, 1]} : vector<16x37xf32> to vector<16x1xf32>
    %299 = vector.shape_cast %298 : vector<16x1xf32> to vector<16x1xf32>
    %300 = vector.broadcast %299 : vector<16x1xf32> to vector<16x32xf32>
    %301 = arith.mulf %300, %296 : vector<16x32xf32>
    %302 = arith.addf %274, %301 : vector<16x32xf32>
    %303 = vector.extract_strided_slice %26 {offsets = [0, 31], sizes = [16, 1], strides = [1, 1]} : vector<16x37xf32> to vector<16x1xf32>
    %304 = vector.shape_cast %303 : vector<16x1xf32> to vector<16x1xf32>
    %305 = vector.broadcast %304 : vector<16x1xf32> to vector<16x32xf32>
    %306 = arith.mulf %305, %296 : vector<16x32xf32>
    %307 = arith.addf %279, %306 : vector<16x32xf32>
    %308 = arith.mulf %305, %297 : vector<16x32xf32>
    %309 = arith.addf %281, %308 : vector<16x32xf32>
    %310 = vector.extract_strided_slice %26 {offsets = [0, 32], sizes = [16, 1], strides = [1, 1]} : vector<16x37xf32> to vector<16x1xf32>
    %311 = vector.shape_cast %310 : vector<16x1xf32> to vector<16x1xf32>
    %312 = vector.broadcast %311 : vector<16x1xf32> to vector<16x32xf32>
    %313 = arith.mulf %312, %296 : vector<16x32xf32>
    %314 = arith.addf %286, %313 : vector<16x32xf32>
    %315 = arith.mulf %312, %297 : vector<16x32xf32>
    %316 = arith.addf %288, %315 : vector<16x32xf32>
    %317 = vector.extract_strided_slice %26 {offsets = [0, 33], sizes = [16, 1], strides = [1, 1]} : vector<16x37xf32> to vector<16x1xf32>
    %318 = vector.shape_cast %317 : vector<16x1xf32> to vector<16x1xf32>
    %319 = vector.broadcast %318 : vector<16x1xf32> to vector<16x32xf32>
    %320 = arith.mulf %319, %296 : vector<16x32xf32>
    %321 = arith.addf %293, %320 : vector<16x32xf32>
    %322 = arith.mulf %319, %297 : vector<16x32xf32>
    %323 = arith.addf %295, %322 : vector<16x32xf32>
    %324 = arith.mulf %155, %155 : vector<16x32xf32>
    %325 = arith.mulf %186, %186 : vector<16x32xf32>
    %326 = vector.extract_strided_slice %26 {offsets = [0, 18], sizes = [16, 1], strides = [1, 1]} : vector<16x37xf32> to vector<16x1xf32>
    %327 = vector.shape_cast %326 : vector<16x1xf32> to vector<16x1xf32>
    %328 = vector.broadcast %327 : vector<16x1xf32> to vector<16x32xf32>
    %329 = arith.mulf %328, %324 : vector<16x32xf32>
    %330 = arith.addf %302, %329 : vector<16x32xf32>
    %331 = vector.extract_strided_slice %26 {offsets = [0, 34], sizes = [16, 1], strides = [1, 1]} : vector<16x37xf32> to vector<16x1xf32>
    %332 = vector.shape_cast %331 : vector<16x1xf32> to vector<16x1xf32>
    %333 = vector.broadcast %332 : vector<16x1xf32> to vector<16x32xf32>
    %334 = arith.mulf %333, %324 : vector<16x32xf32>
    %335 = arith.addf %307, %334 : vector<16x32xf32>
    %336 = arith.mulf %333, %325 : vector<16x32xf32>
    %337 = arith.addf %309, %336 : vector<16x32xf32>
    %338 = vector.extract_strided_slice %26 {offsets = [0, 35], sizes = [16, 1], strides = [1, 1]} : vector<16x37xf32> to vector<16x1xf32>
    %339 = vector.shape_cast %338 : vector<16x1xf32> to vector<16x1xf32>
    %340 = vector.broadcast %339 : vector<16x1xf32> to vector<16x32xf32>
    %341 = arith.mulf %340, %324 : vector<16x32xf32>
    %342 = arith.addf %314, %341 : vector<16x32xf32>
    %343 = arith.mulf %340, %325 : vector<16x32xf32>
    %344 = arith.addf %316, %343 : vector<16x32xf32>
    %345 = vector.extract_strided_slice %26 {offsets = [0, 36], sizes = [16, 1], strides = [1, 1]} : vector<16x37xf32> to vector<16x1xf32>
    %346 = vector.shape_cast %345 : vector<16x1xf32> to vector<16x1xf32>
    %347 = vector.broadcast %346 : vector<16x1xf32> to vector<16x32xf32>
    %348 = arith.mulf %347, %324 : vector<16x32xf32>
    %349 = arith.addf %321, %348 : vector<16x32xf32>
    %350 = arith.mulf %347, %325 : vector<16x32xf32>
    %351 = arith.addf %323, %350 : vector<16x32xf32>
    %352 = arith.mulf %184, %337 : vector<16x32xf32>
    %353 = arith.addf %330, %352 : vector<16x32xf32>
    %354 = arith.mulf %185, %344 : vector<16x32xf32>
    %355 = arith.addf %353, %354 : vector<16x32xf32>
    %356 = arith.mulf %186, %351 : vector<16x32xf32>
    %357 = arith.addf %355, %356 : vector<16x32xf32>
    %c0_49 = arith.constant 0 : index
    %c0_50 = arith.constant 0 : index
    %358 = vector.load %arg14[%c0_49, %c0_50] : memref<32x32xf32, #tpu.memory_space<vmem>>, vector<32x32xf32>
    %cst_51 = arith.constant dense<0.000000e+00> : vector<16x32xf32>
    %359 = tpu.matmul %357, %358, %cst_51 {dimension_numbers = #tpu.dot_dimension_numbers<[1], [0], [0], [1], [0, 0, 1, 1], [], []>} : vector<16x32xf32>, vector<32x32xf32>, vector<16x32xf32> -> vector<16x32xf32>
    %c0_52 = arith.constant 0 : index
    %c0_53 = arith.constant 0 : index
    %360 = vector.load %arg15[%c0_52, %c0_53] : memref<1x32xf32, #tpu.memory_space<vmem>>, vector<1x32xf32>
    %361 = vector.broadcast %360 : vector<1x32xf32> to vector<16x32xf32>
    %362 = arith.addf %359, %361 : vector<16x32xf32>
    %cst_54 = arith.constant -6.000000e+01 : f32
    %363 = vector.broadcast %cst_54 : f32 to vector<16x32xf32>
    %364 = arith.maximumf %362, %363 : vector<16x32xf32>
    %cst_55 = arith.constant 0.000000e+00 : f32
    %365 = vector.broadcast %cst_55 : f32 to vector<16x32xf32>
    %366 = arith.subf %365, %364 : vector<16x32xf32>
    %367 = math.exp %366 : vector<16x32xf32>
    %cst_56 = arith.constant 1.000000e+00 : f32
    %368 = vector.broadcast %cst_56 : f32 to vector<16x32xf32>
    %369 = arith.addf %368, %367 : vector<16x32xf32>
    %370 = tpu.reciprocal %369 {approx = true} : vector<16x32xf32> -> vector<16x32xf32>
    %371 = arith.mulf %369, %370 : vector<16x32xf32>
    %cst_57 = arith.constant 2.000000e+00 : f32
    %372 = vector.broadcast %cst_57 : f32 to vector<16x32xf32>
    %373 = arith.subf %372, %371 : vector<16x32xf32>
    %374 = arith.mulf %370, %373 : vector<16x32xf32>
    %375 = arith.mulf %362, %374 : vector<16x32xf32>
    %c0_58 = arith.constant 0 : index
    %c0_59 = arith.constant 0 : index
    %376 = vector.load %arg16[%c0_58, %c0_59] : memref<32x128xf32, #tpu.memory_space<vmem>>, vector<32x128xf32>
    %cst_60 = arith.constant dense<0.000000e+00> : vector<16x128xf32>
    %377 = tpu.matmul %375, %376, %cst_60 {dimension_numbers = #tpu.dot_dimension_numbers<[1], [0], [0], [1], [0, 0, 1, 1], [], []>} : vector<16x32xf32>, vector<32x128xf32>, vector<16x128xf32> -> vector<16x128xf32>
    %c0_61 = arith.constant 0 : index
    %c0_62 = arith.constant 0 : index
    %378 = vector.load %arg17[%c0_61, %c0_62] : memref<1x128xf32, #tpu.memory_space<vmem>>, vector<1x128xf32>
    %379 = vector.broadcast %378 : vector<1x128xf32> to vector<16x128xf32>
    %380 = arith.addf %377, %379 : vector<16x128xf32>
    %c0_63 = arith.constant 0 : index
    %c0_64 = arith.constant 0 : index
    %381 = vector.load %arg18[%c0_63, %c0_64] : memref<32x128xf32, #tpu.memory_space<vmem>>, vector<32x128xf32>
    %cst_65 = arith.constant dense<0.000000e+00> : vector<16x128xf32>
    %382 = tpu.matmul %335, %381, %cst_65 {dimension_numbers = #tpu.dot_dimension_numbers<[1], [0], [0], [1], [0, 0, 1, 1], [], []>} : vector<16x32xf32>, vector<32x128xf32>, vector<16x128xf32> -> vector<16x128xf32>
    %383 = arith.addf %380, %382 : vector<16x128xf32>
    %c0_66 = arith.constant 0 : index
    %c0_67 = arith.constant 0 : index
    %384 = vector.load %arg19[%c0_66, %c0_67] : memref<32x128xf32, #tpu.memory_space<vmem>>, vector<32x128xf32>
    %cst_68 = arith.constant dense<0.000000e+00> : vector<16x128xf32>
    %385 = tpu.matmul %342, %384, %cst_68 {dimension_numbers = #tpu.dot_dimension_numbers<[1], [0], [0], [1], [0, 0, 1, 1], [], []>} : vector<16x32xf32>, vector<32x128xf32>, vector<16x128xf32> -> vector<16x128xf32>
    %386 = arith.addf %383, %385 : vector<16x128xf32>
    %c0_69 = arith.constant 0 : index
    %c0_70 = arith.constant 0 : index
    %387 = vector.load %arg20[%c0_69, %c0_70] : memref<32x128xf32, #tpu.memory_space<vmem>>, vector<32x128xf32>
    %cst_71 = arith.constant dense<0.000000e+00> : vector<16x128xf32>
    %388 = tpu.matmul %349, %387, %cst_71 {dimension_numbers = #tpu.dot_dimension_numbers<[1], [0], [0], [1], [0, 0, 1, 1], [], []>} : vector<16x32xf32>, vector<32x128xf32>, vector<16x128xf32> -> vector<16x128xf32>
    %389 = arith.addf %386, %388 : vector<16x128xf32>
    %c0_72 = arith.constant 0 : index
    %c0_73 = arith.constant 0 : index
    %390 = vector.load %arg21[%c0_72, %c0_73] : memref<16x128xf32, #tpu.memory_space<vmem>>, vector<16x128xf32>
    tpu.vector_store %arg21[%c0_72, %c0_73], %389 {strides = array<i32>} : memref<16x128xf32, #tpu.memory_space<vmem>>, vector<16x128xf32>,
    return
  }
  func.func @transform_0(%arg0: i32) -> (i32, i32) {
    %c0_i32 = arith.constant 0 : i32
    %c0_i32_0 = arith.constant 0 : i32
    return %arg0, %c0_i32 : i32, i32
  }
  func.func @transform_1(%arg0: i32) -> (i32, i32, i32) {
    %c0_i32 = arith.constant 0 : i32
    %c0_i32_0 = arith.constant 0 : i32
    %c0_i32_1 = arith.constant 0 : i32
    return %c0_i32, %arg0, %c0_i32_0 : i32, i32, i32
  }
  func.func @transform_2(%arg0: i32) -> (i32, i32) {
    %c0_i32 = arith.constant 0 : i32
    %c0_i32_0 = arith.constant 0 : i32
    return %arg0, %c0_i32 : i32, i32
  }
  func.func @transform_3(%arg0: i32) -> (i32, i32) {
    %c0_i32 = arith.constant 0 : i32
    %c0_i32_0 = arith.constant 0 : i32
    %c0_i32_1 = arith.constant 0 : i32
    return %c0_i32, %c0_i32_0 : i32, i32
  }
  func.func @transform_4(%arg0: i32) -> (i32, i32) {
    %c0_i32 = arith.constant 0 : i32
    %c0_i32_0 = arith.constant 0 : i32
    %c0_i32_1 = arith.constant 0 : i32
    return %c0_i32, %c0_i32_0 : i32, i32
  }
  func.func @transform_5(%arg0: i32) -> (i32, i32) {
    %c0_i32 = arith.constant 0 : i32
    %c0_i32_0 = arith.constant 0 : i32
    %c0_i32_1 = arith.constant 0 : i32
    return %c0_i32, %c0_i32_0 : i32, i32
  }
  func.func @transform_6(%arg0: i32) -> (i32, i32) {
    %c0_i32 = arith.constant 0 : i32
    %c0_i32_0 = arith.constant 0 : i32
    %c0_i32_1 = arith.constant 0 : i32
    return %c0_i32, %c0_i32_0 : i32, i32
  }
  func.func @transform_7(%arg0: i32) -> (i32, i32) {
    %c0_i32 = arith.constant 0 : i32
    %c0_i32_0 = arith.constant 0 : i32
    %c0_i32_1 = arith.constant 0 : i32
    return %c0_i32, %c0_i32_0 : i32, i32
  }
  func.func @transform_8(%arg0: i32) -> (i32, i32) {
    %c0_i32 = arith.constant 0 : i32
    %c0_i32_0 = arith.constant 0 : i32
    %c0_i32_1 = arith.constant 0 : i32
    return %c0_i32, %c0_i32_0 : i32, i32
  }
  func.func @transform_9(%arg0: i32) -> (i32, i32) {
    %c0_i32 = arith.constant 0 : i32
    %c0_i32_0 = arith.constant 0 : i32
    %c0_i32_1 = arith.constant 0 : i32
    return %c0_i32, %c0_i32_0 : i32, i32
  }
  func.func @transform_10(%arg0: i32) -> (i32, i32) {
    %c0_i32 = arith.constant 0 : i32
    %c0_i32_0 = arith.constant 0 : i32
    %c0_i32_1 = arith.constant 0 : i32
    return %c0_i32, %c0_i32_0 : i32, i32
  }
  func.func @transform_11(%arg0: i32) -> (i32, i32) {
    %c0_i32 = arith.constant 0 : i32
    %c0_i32_0 = arith.constant 0 : i32
    %c0_i32_1 = arith.constant 0 : i32
    return %c0_i32, %c0_i32_0 : i32, i32
  }
  func.func @transform_12(%arg0: i32) -> (i32, i32) {
    %c0_i32 = arith.constant 0 : i32
    %c0_i32_0 = arith.constant 0 : i32
    %c0_i32_1 = arith.constant 0 : i32
    return %c0_i32, %c0_i32_0 : i32, i32
  }
  func.func @transform_13(%arg0: i32) -> (i32, i32) {
    %c0_i32 = arith.constant 0 : i32
    %c0_i32_0 = arith.constant 0 : i32
    %c0_i32_1 = arith.constant 0 : i32
    return %c0_i32, %c0_i32_0 : i32, i32
  }
  func.func @transform_14(%arg0: i32) -> (i32, i32) {
    %c0_i32 = arith.constant 0 : i32
    %c0_i32_0 = arith.constant 0 : i32
    %c0_i32_1 = arith.constant 0 : i32
    return %c0_i32, %c0_i32_0 : i32, i32
  }
  func.func @transform_15(%arg0: i32) -> (i32, i32) {
    %c0_i32 = arith.constant 0 : i32
    %c0_i32_0 = arith.constant 0 : i32
    %c0_i32_1 = arith.constant 0 : i32
    return %c0_i32, %c0_i32_0 : i32, i32
  }
  func.func @transform_16(%arg0: i32) -> (i32, i32) {
    %c0_i32 = arith.constant 0 : i32
    %c0_i32_0 = arith.constant 0 : i32
    %c0_i32_1 = arith.constant 0 : i32
    return %c0_i32, %c0_i32_0 : i32, i32
  }
  func.func @transform_17(%arg0: i32) -> (i32, i32) {
    %c0_i32 = arith.constant 0 : i32
    %c0_i32_0 = arith.constant 0 : i32
    %c0_i32_1 = arith.constant 0 : i32
    return %c0_i32, %c0_i32_0 : i32, i32
  }
  func.func @transform_18(%arg0: i32) -> (i32, i32) {
    %c0_i32 = arith.constant 0 : i32
    %c0_i32_0 = arith.constant 0 : i32
    %c0_i32_1 = arith.constant 0 : i32
    return %c0_i32, %c0_i32_0 : i32, i32
  }
  func.func @transform_19(%arg0: i32) -> (i32, i32) {
    %c0_i32 = arith.constant 0 : i32
    %c0_i32_0 = arith.constant 0 : i32
    %c0_i32_1 = arith.constant 0 : i32
    return %c0_i32, %c0_i32_0 : i32, i32
  }
  func.func @transform_20(%arg0: i32) -> (i32, i32) {
    %c0_i32 = arith.constant 0 : i32
    %c0_i32_0 = arith.constant 0 : i32
    return %arg0, %c0_i32 : i32, i32
  }
}

</mosaic_0001>

<llo_original>
// kernel: tpu_custom_call.1
$region0: #{tpu_custom_call.1}
  #allocation0 [shape = 'u32[]', space=smem, size = 0x4, offset = 0x4, fixed_abs, tag = 'smem constant byte address 0x4 - core index']
  #allocation1 [shape = 'u32[72,128]{1,0:T(1,128)}', space=vmem, size = 0x9000, scoped, tag = 'internal scratch']
  %s0 = inlined_call_operand.vmem [shape: f32[64,32], index: 0, kind: input, shape index: {}]
  %s1 = inlined_call_operand.vmem [shape: f32[3,64,32], index: 1, kind: input, shape index: {}]
  %s2 = inlined_call_operand.vmem [shape: f32[64,37], index: 2, kind: input, shape index: {}]
  %s3 = inlined_call_operand.vmem [shape: f32[32,32], index: 3, kind: input, shape index: {}]
  %s4 = inlined_call_operand.vmem [shape: f32[1,32], index: 4, kind: input, shape index: {}]
  %s5 = inlined_call_operand.vmem [shape: f32[32,32], index: 5, kind: input, shape index: {}]
  %s6 = inlined_call_operand.vmem [shape: f32[1,32], index: 6, kind: input, shape index: {}]
  %s7 = inlined_call_operand.vmem [shape: f32[32,32], index: 7, kind: input, shape index: {}]
  %s8 = inlined_call_operand.vmem [shape: f32[1,32], index: 8, kind: input, shape index: {}]
  %s9 = inlined_call_operand.vmem [shape: f32[32,32], index: 9, kind: input, shape index: {}]
  %s10 = inlined_call_operand.vmem [shape: f32[1,32], index: 10, kind: input, shape index: {}]
  %s11 = inlined_call_operand.vmem [shape: f32[32,32], index: 11, kind: input, shape index: {}]
  %s12 = inlined_call_operand.vmem [shape: f32[1,32], index: 12, kind: input, shape index: {}]
  %s13 = inlined_call_operand.vmem [shape: f32[32,32], index: 13, kind: input, shape index: {}]
  %s14 = inlined_call_operand.vmem [shape: f32[1,32], index: 14, kind: input, shape index: {}]
  %s15 = inlined_call_operand.vmem [shape: f32[32,128], index: 15, kind: input, shape index: {}]
  %s16 = inlined_call_operand.vmem [shape: f32[1,128], index: 16, kind: input, shape index: {}]
  %s17 = inlined_call_operand.vmem [shape: f32[32,128], index: 17, kind: input, shape index: {}]
  %s18 = inlined_call_operand.vmem [shape: f32[32,128], index: 18, kind: input, shape index: {}]
  %s19 = inlined_call_operand.vmem [shape: f32[32,128], index: 19, kind: input, shape index: {}]
  %s20 = inlined_call_operand.hbm [shape: f32[64,128], index: 20, kind: output, shape index: {}]
  %s21 = sld [smem:[#allocation0]]
  $region151: #{tpu_custom_call.1} parent=0
    _
  %s23 = ssub.s32 1, %s21
  %s24 = scalar_select 0, %s23, %s21
  $region1: #{tpu_custom_call.1} parent=0
    #allocation2 [shape = 'u8[49152]{0}', space=vmem, size = 0xc000, scoped, tag = 'input window, operand 1']
    #allocation3 [shape = 'u8[16384]{0}', space=vmem, size = 0x4000, scoped, tag = 'output window, operand 0']
    #allocation4 [shape = 's32[2]{0}', space=sflag, size = 0x8, scoped, tag = 'scoped memory for tpu_custom_call.1']
    %25 = vsyncpa [#allocation4], 0
    %s26 = scalar_lea.sflag [#allocation4], 1
    %27 = vsyncpa %s26, 0
    loop: start=0, step=1, limit=6
    $region2: #{tpu_custom_call.1} parent=1 // loop_pre_header
      _
    $region3: #{tpu_custom_call.1} parent=1 // loop_header
      %s29 = sphi 0, %s33
      %p30 = scmp.ge.s32.totalorder %s29, 6
      %s39 = sphi 0, %s41
      %s42 = sphi 0, %s39
      %s43 = sphi 0, %s42
      %s59 = sphi 0, %s43
      %s65 = sphi 0, %s67
      %s68 = sphi 0, %s65
      %s69 = sphi 0, %s68
      %s85 = sphi 0, %s69
      %s91 = sphi 0, %s93
      %s94 = sphi 0, %s91
      %s95 = sphi 0, %s94
      %s111 = sphi 0, %s95
      %s115 = sphi 0, %s115
      %s117 = sphi 0, %s115
      %s118 = sphi 0, %s117
      %s132 = sphi 0, %s118
      %s136 = sphi 0, %s136
      %s138 = sphi 0, %s136
      %s139 = sphi 0, %s138
      %s153 = sphi 0, %s139
      %s157 = sphi 0, %s157
      %s159 = sphi 0, %s157
      %s160 = sphi 0, %s159
      %s174 = sphi 0, %s160
      %s178 = sphi 0, %s178
      %s180 = sphi 0, %s178
      %s181 = sphi 0, %s180
      %s195 = sphi 0, %s181
      %s199 = sphi 0, %s199
      %s201 = sphi 0, %s199
      %s202 = sphi 0, %s201
      %s216 = sphi 0, %s202
      %s220 = sphi 0, %s220
      %s222 = sphi 0, %s220
      %s223 = sphi 0, %s222
      %s237 = sphi 0, %s223
      %s241 = sphi 0, %s241
      %s243 = sphi 0, %s241
      %s244 = sphi 0, %s243
      %s258 = sphi 0, %s244
      %s262 = sphi 0, %s262
      %s264 = sphi 0, %s262
      %s265 = sphi 0, %s264
      %s279 = sphi 0, %s265
      %s283 = sphi 0, %s283
      %s285 = sphi 0, %s283
      %s286 = sphi 0, %s285
      %s300 = sphi 0, %s286
      %s304 = sphi 0, %s304
      %s306 = sphi 0, %s304
      %s307 = sphi 0, %s306
      %s321 = sphi 0, %s307
      %s325 = sphi 0, %s325
      %s327 = sphi 0, %s325
      %s328 = sphi 0, %s327
      %s342 = sphi 0, %s328
      %s346 = sphi 0, %s346
      %s348 = sphi 0, %s346
      %s349 = sphi 0, %s348
      %s363 = sphi 0, %s349
      %s367 = sphi 0, %s367
      %s369 = sphi 0, %s367
      %s370 = sphi 0, %s369
      %s384 = sphi 0, %s370
      %s388 = sphi 0, %s388
      %s390 = sphi 0, %s388
      %s391 = sphi 0, %s390
      %s405 = sphi 0, %s391
      %s409 = sphi 0, %s409
      %s411 = sphi 0, %s409
      %s412 = sphi 0, %s411
      %s426 = sphi 0, %s412
      %s430 = sphi 0, %s430
      %s432 = sphi 0, %s430
      %s433 = sphi 0, %s432
      %s447 = sphi 0, %s433
      %s451 = sphi 0, %s451
      %s453 = sphi 0, %s451
      %s454 = sphi 0, %s453
      %s468 = sphi 0, %s454
      %s474 = sphi 0, %s476
      %s477 = sphi 0, %s474
      %s478 = sphi 0, %s477
      %s494 = sphi 0, %s478
    $region4: #{tpu_custom_call.1} parent=1 // loop_header_branch
      %32 = sbr.rel (%p30) target = $region8
    $region5: #{tpu_custom_call.1} parent=1 // loop_body
      %s34 = ssub.s32 %s29, 1
      %s35 = ssub.s32 %s29, 2
      %s36 = sadd.s32 %s29, 1
      %s37 = ssub.s32 %s29, %s36
      %p38 = scmp.eq.s32.totalorder %s37, 0
      %s40 = sadd.s32 %s39, 1
      %s41 = scalar_select %p38, %s39, %s40
      %p44 = pneg %p38
      %p45 = scmp.eq.s32.totalorder %s29, 3
      %p46 = por %p44, %p45
      %p47 = scmp.ne.s32.totalorder %s39, %s42
      %p48 = scmp.eq.s32.totalorder %s29, 0
      %p49 = por %p47, %p48
      %p50 = scmp.ne.s32.totalorder %s39, %s42
      %p51 = scmp.eq.s32.totalorder %s34, 3
      %p52 = por %p50, %p51
      %p53 = scmp.ne.s32.totalorder %s42, %s43
      %p54 = scmp.eq.s32.totalorder %s34, 0
      %p55 = por %p53, %p54
      %p56 = scmp.ne.s32.totalorder %s42, %s43
      %p57 = scmp.eq.s32.totalorder %s35, 3
      %p58 = por %p56, %p57
      %p60 = scmp.ne.s32.totalorder %s43, %s59
      %p61 = scmp.eq.s32.totalorder %s35, 0
      %p62 = por %p60, %p61
      %s63 = ssub.s32 %s29, %s36
      %p64 = scmp.eq.s32.totalorder %s63, 0
      %s66 = sadd.s32 %s65, 1
      %s67 = scalar_select %p64, %s65, %s66
      %p70 = pneg %p64
      %p71 = scmp.eq.s32.totalorder %s29, 3
      %p72 = por %p70, %p71
      %p73 = scmp.ne.s32.totalorder %s65, %s68
      %p74 = scmp.eq.s32.totalorder %s29, 0
      %p75 = por %p73, %p74
      %p76 = scmp.ne.s32.totalorder %s65, %s68
      %p77 = scmp.eq.s32.totalorder %s34, 3
      %p78 = por %p76, %p77
      %p79 = scmp.ne.s32.totalorder %s68, %s69
      %p80 = scmp.eq.s32.totalorder %s34, 0
      %p81 = por %p79, %p80
      %p82 = scmp.ne.s32.totalorder %s68, %s69
      %p83 = scmp.eq.s32.totalorder %s35, 3
      %p84 = por %p82, %p83
      %p86 = scmp.ne.s32.totalorder %s69, %s85
      %p87 = scmp.eq.s32.totalorder %s35, 0
      %p88 = por %p86, %p87
      %s89 = ssub.s32 %s29, %s36
      %p90 = scmp.eq.s32.totalorder %s89, 0
      %s92 = sadd.s32 %s91, 1
      %s93 = scalar_select %p90, %s91, %s92
      %p96 = pneg %p90
      %p97 = scmp.eq.s32.totalorder %s29, 3
      %p98 = por %p96, %p97
      %p99 = scmp.ne.s32.totalorder %s91, %s94
      %p100 = scmp.eq.s32.totalorder %s29, 0
      %p101 = por %p99, %p100
      %p102 = scmp.ne.s32.totalorder %s91, %s94
      %p103 = scmp.eq.s32.totalorder %s34, 3
      %p104 = por %p102, %p103
      %p105 = scmp.ne.s32.totalorder %s94, %s95
      %p106 = scmp.eq.s32.totalorder %s34, 0
      %p107 = por %p105, %p106
      %p108 = scmp.ne.s32.totalorder %s94, %s95
      %p109 = scmp.eq.s32.totalorder %s35, 3
      %p110 = por %p108, %p109
      %p112 = scmp.ne.s32.totalorder %s95, %s111
      %p113 = scmp.eq.s32.totalorder %s35, 0
      %p114 = por %p112, %p113
      %s116 = sadd.s32 %s115, 1
      %p119 = scmp.eq.s32.totalorder %s29, 3
      %p120 = scmp.ne.s32.totalorder %s115, %s117
      %p121 = scmp.eq.s32.totalorder %s29, 0
      %p122 = por %p120, %p121
      %p123 = scmp.ne.s32.totalorder %s115, %s117
      %p124 = scmp.eq.s32.totalorder %s34, 3
      %p125 = por %p123, %p124
      %p126 = scmp.ne.s32.totalorder %s117, %s118
      %p127 = scmp.eq.s32.totalorder %s34, 0
      %p128 = por %p126, %p127
      %p129 = scmp.ne.s32.totalorder %s117, %s118
      %p130 = scmp.eq.s32.totalorder %s35, 3
      %p131 = por %p129, %p130
      %p133 = scmp.ne.s32.totalorder %s118, %s132
      %p134 = scmp.eq.s32.totalorder %s35, 0
      %p135 = por %p133, %p134
      %s137 = sadd.s32 %s136, 1
      %p140 = scmp.eq.s32.totalorder %s29, 3
      %p141 = scmp.ne.s32.totalorder %s136, %s138
      %p142 = scmp.eq.s32.totalorder %s29, 0
      %p143 = por %p141, %p142
      %p144 = scmp.ne.s32.totalorder %s136, %s138
      %p145 = scmp.eq.s32.totalorder %s34, 3
      %p146 = por %p144, %p145
      %p147 = scmp.ne.s32.totalorder %s138, %s139
      %p148 = scmp.eq.s32.totalorder %s34, 0
      %p149 = por %p147, %p148
      %p150 = scmp.ne.s32.totalorder %s138, %s139
      %p151 = scmp.eq.s32.totalorder %s35, 3
      %p152 = por %p150, %p151
      %p154 = scmp.ne.s32.totalorder %s139, %s153
      %p155 = scmp.eq.s32.totalorder %s35, 0
      %p156 = por %p154, %p155
      %s158 = sadd.s32 %s157, 1
      %p161 = scmp.eq.s32.totalorder %s29, 3
      %p162 = scmp.ne.s32.totalorder %s157, %s159
      %p163 = scmp.eq.s32.totalorder %s29, 0
      %p164 = por %p162, %p163
      %p165 = scmp.ne.s32.totalorder %s157, %s159
      %p166 = scmp.eq.s32.totalorder %s34, 3
      %p167 = por %p165, %p166
      %p168 = scmp.ne.s32.totalorder %s159, %s160
      %p169 = scmp.eq.s32.totalorder %s34, 0
      %p170 = por %p168, %p169
      %p171 = scmp.ne.s32.totalorder %s159, %s160
      %p172 = scmp.eq.s32.totalorder %s35, 3
      %p173 = por %p171, %p172
      %p175 = scmp.ne.s32.totalorder %s160, %s174
      %p176 = scmp.eq.s32.totalorder %s35, 0
      %p177 = por %p175, %p176
      %s179 = sadd.s32 %s178, 1
      %p182 = scmp.eq.s32.totalorder %s29, 3
      %p183 = scmp.ne.s32.totalorder %s178, %s180
      %p184 = scmp.eq.s32.totalorder %s29, 0
      %p185 = por %p183, %p184
      %p186 = scmp.ne.s32.totalorder %s178, %s180
      %p187 = scmp.eq.s32.totalorder %s34, 3
      %p188 = por %p186, %p187
      %p189 = scmp.ne.s32.totalorder %s180, %s181
      %p190 = scmp.eq.s32.totalorder %s34, 0
      %p191 = por %p189, %p190
      %p192 = scmp.ne.s32.totalorder %s180, %s181
      %p193 = scmp.eq.s32.totalorder %s35, 3
      %p194 = por %p192, %p193
      %p196 = scmp.ne.s32.totalorder %s181, %s195
      %p197 = scmp.eq.s32.totalorder %s35, 0
      %p198 = por %p196, %p197
      %s200 = sadd.s32 %s199, 1
      %p203 = scmp.eq.s32.totalorder %s29, 3
      %p204 = scmp.ne.s32.totalorder %s199, %s201
      %p205 = scmp.eq.s32.totalorder %s29, 0
      %p206 = por %p204, %p205
      %p207 = scmp.ne.s32.totalorder %s199, %s201
      %p208 = scmp.eq.s32.totalorder %s34, 3
      %p209 = por %p207, %p208
      %p210 = scmp.ne.s32.totalorder %s201, %s202
      %p211 = scmp.eq.s32.totalorder %s34, 0
      %p212 = por %p210, %p211
      %p213 = scmp.ne.s32.totalorder %s201, %s202
      %p214 = scmp.eq.s32.totalorder %s35, 3
      %p215 = por %p213, %p214
      %p217 = scmp.ne.s32.totalorder %s202, %s216
      %p218 = scmp.eq.s32.totalorder %s35, 0
      %p219 = por %p217, %p218
      %s221 = sadd.s32 %s220, 1
      %p224 = scmp.eq.s32.totalorder %s29, 3
      %p225 = scmp.ne.s32.totalorder %s220, %s222
      %p226 = scmp.eq.s32.totalorder %s29, 0
      %p227 = por %p225, %p226
      %p228 = scmp.ne.s32.totalorder %s220, %s222
      %p229 = scmp.eq.s32.totalorder %s34, 3
      %p230 = por %p228, %p229
      %p231 = scmp.ne.s32.totalorder %s222, %s223
      %p232 = scmp.eq.s32.totalorder %s34, 0
      %p233 = por %p231, %p232
      %p234 = scmp.ne.s32.totalorder %s222, %s223
      %p235 = scmp.eq.s32.totalorder %s35, 3
      %p236 = por %p234, %p235
      %p238 = scmp.ne.s32.totalorder %s223, %s237
      %p239 = scmp.eq.s32.totalorder %s35, 0
      %p240 = por %p238, %p239
      %s242 = sadd.s32 %s241, 1
      %p245 = scmp.eq.s32.totalorder %s29, 3
      %p246 = scmp.ne.s32.totalorder %s241, %s243
      %p247 = scmp.eq.s32.totalorder %s29, 0
      %p248 = por %p246, %p247
      %p249 = scmp.ne.s32.totalorder %s241, %s243
      %p250 = scmp.eq.s32.totalorder %s34, 3
      %p251 = por %p249, %p250
      %p252 = scmp.ne.s32.totalorder %s243, %s244
      %p253 = scmp.eq.s32.totalorder %s34, 0
      %p254 = por %p252, %p253
      %p255 = scmp.ne.s32.totalorder %s243, %s244
      %p256 = scmp.eq.s32.totalorder %s35, 3
      %p257 = por %p255, %p256
      %p259 = scmp.ne.s32.totalorder %s244, %s258
      %p260 = scmp.eq.s32.totalorder %s35, 0
      %p261 = por %p259, %p260
      %s263 = sadd.s32 %s262, 1
      %p266 = scmp.eq.s32.totalorder %s29, 3
      %p267 = scmp.ne.s32.totalorder %s262, %s264
      %p268 = scmp.eq.s32.totalorder %s29, 0
      %p269 = por %p267, %p268
      %p270 = scmp.ne.s32.totalorder %s262, %s264
      %p271 = scmp.eq.s32.totalorder %s34, 3
      %p272 = por %p270, %p271
      %p273 = scmp.ne.s32.totalorder %s264, %s265
      %p274 = scmp.eq.s32.totalorder %s34, 0
      %p275 = por %p273, %p274
      %p276 = scmp.ne.s32.totalorder %s264, %s265
      %p277 = scmp.eq.s32.totalorder %s35, 3
      %p278 = por %p276, %p277
      %p280 = scmp.ne.s32.totalorder %s265, %s279
      %p281 = scmp.eq.s32.totalorder %s35, 0
      %p282 = por %p280, %p281
      %s284 = sadd.s32 %s283, 1
      %p287 = scmp.eq.s32.totalorder %s29, 3
      %p288 = scmp.ne.s32.totalorder %s283, %s285
      %p289 = scmp.eq.s32.totalorder %s29, 0
      %p290 = por %p288, %p289
      %p291 = scmp.ne.s32.totalorder %s283, %s285
      %p292 = scmp.eq.s32.totalorder %s34, 3
      %p293 = por %p291, %p292
      %p294 = scmp.ne.s32.totalorder %s285, %s286
      %p295 = scmp.eq.s32.totalorder %s34, 0
      %p296 = por %p294, %p295
      %p297 = scmp.ne.s32.totalorder %s285, %s286
      %p298 = scmp.eq.s32.totalorder %s35, 3
      %p299 = por %p297, %p298
      %p301 = scmp.ne.s32.totalorder %s286, %s300
      %p302 = scmp.eq.s32.totalorder %s35, 0
      %p303 = por %p301, %p302
      %s305 = sadd.s32 %s304, 1
      %p308 = scmp.eq.s32.totalorder %s29, 3
      %p309 = scmp.ne.s32.totalorder %s304, %s306
      %p310 = scmp.eq.s32.totalorder %s29, 0
      %p311 = por %p309, %p310
      %p312 = scmp.ne.s32.totalorder %s304, %s306
      %p313 = scmp.eq.s32.totalorder %s34, 3
      %p314 = por %p312, %p313
      %p315 = scmp.ne.s32.totalorder %s306, %s307
      %p316 = scmp.eq.s32.totalorder %s34, 0
      %p317 = por %p315, %p316
      %p318 = scmp.ne.s32.totalorder %s306, %s307
      %p319 = scmp.eq.s32.totalorder %s35, 3
      %p320 = por %p318, %p319
      %p322 = scmp.ne.s32.totalorder %s307, %s321
      %p323 = scmp.eq.s32.totalorder %s35, 0
      %p324 = por %p322, %p323
      %s326 = sadd.s32 %s325, 1
      %p329 = scmp.eq.s32.totalorder %s29, 3
      %p330 = scmp.ne.s32.totalorder %s325, %s327
      %p331 = scmp.eq.s32.totalorder %s29, 0
      %p332 = por %p330, %p331
      %p333 = scmp.ne.s32.totalorder %s325, %s327
      %p334 = scmp.eq.s32.totalorder %s34, 3
      %p335 = por %p333, %p334
      %p336 = scmp.ne.s32.totalorder %s327, %s328
      %p337 = scmp.eq.s32.totalorder %s34, 0
      %p338 = por %p336, %p337
      %p339 = scmp.ne.s32.totalorder %s327, %s328
      %p340 = scmp.eq.s32.totalorder %s35, 3
      %p341 = por %p339, %p340
      %p343 = scmp.ne.s32.totalorder %s328, %s342
      %p344 = scmp.eq.s32.totalorder %s35, 0
      %p345 = por %p343, %p344
      %s347 = sadd.s32 %s346, 1
      %p350 = scmp.eq.s32.totalorder %s29, 3
      %p351 = scmp.ne.s32.totalorder %s346, %s348
      %p352 = scmp.eq.s32.totalorder %s29, 0
      %p353 = por %p351, %p352
      %p354 = scmp.ne.s32.totalorder %s346, %s348
      %p355 = scmp.eq.s32.totalorder %s34, 3
      %p356 = por %p354, %p355
      %p357 = scmp.ne.s32.totalorder %s348, %s349
      %p358 = scmp.eq.s32.totalorder %s34, 0
      %p359 = por %p357, %p358
      %p360 = scmp.ne.s32.totalorder %s348, %s349
      %p361 = scmp.eq.s32.totalorder %s35, 3
      %p362 = por %p360, %p361
      %p364 = scmp.ne.s32.totalorder %s349, %s363
      %p365 = scmp.eq.s32.totalorder %s35, 0
      %p366 = por %p364, %p365
      %s368 = sadd.s32 %s367, 1
      %p371 = scmp.eq.s32.totalorder %s29, 3
      %p372 = scmp.ne.s32.totalorder %s367, %s369
      %p373 = scmp.eq.s32.totalorder %s29, 0
      %p374 = por %p372, %p373
      %p375 = scmp.ne.s32.totalorder %s367, %s369
      %p376 = scmp.eq.s32.totalorder %s34, 3
      %p377 = por %p375, %p376
      %p378 = scmp.ne.s32.totalorder %s369, %s370
      %p379 = scmp.eq.s32.totalorder %s34, 0
      %p380 = por %p378, %p379
      %p381 = scmp.ne.s32.totalorder %s369, %s370
      %p382 = scmp.eq.s32.totalorder %s35, 3
      %p383 = por %p381, %p382
      %p385 = scmp.ne.s32.totalorder %s370, %s384
      %p386 = scmp.eq.s32.totalorder %s35, 0
      %p387 = por %p385, %p386
      %s389 = sadd.s32 %s388, 1
      %p392 = scmp.eq.s32.totalorder %s29, 3
      %p393 = scmp.ne.s32.totalorder %s388, %s390
      %p394 = scmp.eq.s32.totalorder %s29, 0
      %p395 = por %p393, %p394
      %p396 = scmp.ne.s32.totalorder %s388, %s390
      %p397 = scmp.eq.s32.totalorder %s34, 3
      %p398 = por %p396, %p397
      %p399 = scmp.ne.s32.totalorder %s390, %s391
      %p400 = scmp.eq.s32.totalorder %s34, 0
      %p401 = por %p399, %p400
      %p402 = scmp.ne.s32.totalorder %s390, %s391
      %p403 = scmp.eq.s32.totalorder %s35, 3
      %p404 = por %p402, %p403
      %p406 = scmp.ne.s32.totalorder %s391, %s405
      %p407 = scmp.eq.s32.totalorder %s35, 0
      %p408 = por %p406, %p407
      %s410 = sadd.s32 %s409, 1
      %p413 = scmp.eq.s32.totalorder %s29, 3
      %p414 = scmp.ne.s32.totalorder %s409, %s411
      %p415 = scmp.eq.s32.totalorder %s29, 0
      %p416 = por %p414, %p415
      %p417 = scmp.ne.s32.totalorder %s409, %s411
      %p418 = scmp.eq.s32.totalorder %s34, 3
      %p419 = por %p417, %p418
      %p420 = scmp.ne.s32.totalorder %s411, %s412
      %p421 = scmp.eq.s32.totalorder %s34, 0
      %p422 = por %p420, %p421
      %p423 = scmp.ne.s32.totalorder %s411, %s412
      %p424 = scmp.eq.s32.totalorder %s35, 3
      %p425 = por %p423, %p424
      %p427 = scmp.ne.s32.totalorder %s412, %s426
      %p428 = scmp.eq.s32.totalorder %s35, 0
      %p429 = por %p427, %p428
      %s431 = sadd.s32 %s430, 1
      %p434 = scmp.eq.s32.totalorder %s29, 3
      %p435 = scmp.ne.s32.totalorder %s430, %s432
      %p436 = scmp.eq.s32.totalorder %s29, 0
      %p437 = por %p435, %p436
      %p438 = scmp.ne.s32.totalorder %s430, %s432
      %p439 = scmp.eq.s32.totalorder %s34, 3
      %p440 = por %p438, %p439
      %p441 = scmp.ne.s32.totalorder %s432, %s433
      %p442 = scmp.eq.s32.totalorder %s34, 0
      %p443 = por %p441, %p442
      %p444 = scmp.ne.s32.totalorder %s432, %s433
      %p445 = scmp.eq.s32.totalorder %s35, 3
      %p446 = por %p444, %p445
      %p448 = scmp.ne.s32.totalorder %s433, %s447
      %p449 = scmp.eq.s32.totalorder %s35, 0
      %p450 = por %p448, %p449
      %s452 = sadd.s32 %s451, 1
      %p455 = scmp.eq.s32.totalorder %s29, 3
      %p456 = scmp.ne.s32.totalorder %s451, %s453
      %p457 = scmp.eq.s32.totalorder %s29, 0
      %p458 = por %p456, %p457
      %p459 = scmp.ne.s32.totalorder %s451, %s453
      %p460 = scmp.eq.s32.totalorder %s34, 3
      %p461 = por %p459, %p460
      %p462 = scmp.ne.s32.totalorder %s453, %s454
      %p463 = scmp.eq.s32.totalorder %s34, 0
      %p464 = por %p462, %p463
      %p465 = scmp.ne.s32.totalorder %s453, %s454
      %p466 = scmp.eq.s32.totalorder %s35, 3
      %p467 = por %p465, %p466
      %p469 = scmp.ne.s32.totalorder %s454, %s468
      %p470 = scmp.eq.s32.totalorder %s35, 0
      %p471 = por %p469, %p470
      %s472 = ssub.s32 %s29, %s36
      %p473 = scmp.eq.s32.totalorder %s472, 0
      %s475 = sadd.s32 %s474, 1
      %s476 = scalar_select %p473, %s474, %s475
      %p479 = pneg %p473
      %p480 = scmp.eq.s32.totalorder %s29, 3
      %p481 = por %p479, %p480
      %p482 = scmp.ne.s32.totalorder %s474, %s477
      %p483 = scmp.eq.s32.totalorder %s29, 0
      %p484 = por %p482, %p483
      %p485 = scmp.ne.s32.totalorder %s474, %s477
      %p486 = scmp.eq.s32.totalorder %s34, 3
      %p487 = por %p485, %p486
      %p488 = scmp.ne.s32.totalorder %s477, %s478
      %p489 = scmp.eq.s32.totalorder %s34, 0
      %p490 = por %p488, %p489
      %p491 = scmp.ne.s32.totalorder %s477, %s478
      %p492 = scmp.eq.s32.totalorder %s35, 3
      %p493 = por %p491, %p492
      %p495 = scmp.ne.s32.totalorder %s478, %s494
      %p496 = scmp.eq.s32.totalorder %s35, 0
      %p497 = por %p495, %p496
      %p498 = scmp.le.s32.totalorder 1, %s29
      %p499 = scmp.lt.s32.totalorder %s29, 5
      %p500 = pnand %p498, %p499
      %p501 = pneg %p500
      // Predicated region
      $region9: #{tpu_custom_call.1} parent=5 // pred_check
        _
      $region10: #{tpu_custom_call.1} parent=5 // pred_check_branch
        %503 = sbr.rel (%p500) target = $region12
      $region11: #{tpu_custom_call.1} parent=5 // pred_region
        %s504 = ssub.s32 %s29, 1
        // Predicated region
        $region13: #{tpu_custom_call.1} parent=11 // pred_check
          %p505 = pneg %p128
        $region14: #{tpu_custom_call.1} parent=11 // pred_check_branch
          %507 = sbr.rel (%p505) target = $region16
        $region15: #{tpu_custom_call.1} parent=11 // pred_region
          _
        $region16: #{tpu_custom_call.1} parent=11 // pred_fallthru
          _
        // Predicated region
        $region17: #{tpu_custom_call.1} parent=11 // pred_check
          %p508 = pneg %p149
        $region18: #{tpu_custom_call.1} parent=11 // pred_check_branch
          %510 = sbr.rel (%p508) target = $region20
        $region19: #{tpu_custom_call.1} parent=11 // pred_region
          _
        $region20: #{tpu_custom_call.1} parent=11 // pred_fallthru
          _
        // Predicated region
        $region21: #{tpu_custom_call.1} parent=11 // pred_check
          %p511 = pneg %p170
        $region22: #{tpu_custom_call.1} parent=11 // pred_check_branch
          %513 = sbr.rel (%p511) target = $region24
        $region23: #{tpu_custom_call.1} parent=11 // pred_region
          _
        $region24: #{tpu_custom_call.1} parent=11 // pred_fallthru
          _
        // Predicated region
        $region25: #{tpu_custom_call.1} parent=11 // pred_check
          %p514 = pneg %p191
        $region26: #{tpu_custom_call.1} parent=11 // pred_check_branch
          %516 = sbr.rel (%p514) target = $region28
        $region27: #{tpu_custom_call.1} parent=11 // pred_region
          _
        $region28: #{tpu_custom_call.1} parent=11 // pred_fallthru
          _
        // Predicated region
        $region29: #{tpu_custom_call.1} parent=11 // pred_check
          %p517 = pneg %p212
        $region30: #{tpu_custom_call.1} parent=11 // pred_check_branch
          %519 = sbr.rel (%p517) target = $region32
        $region31: #{tpu_custom_call.1} parent=11 // pred_region
          _
        $region32: #{tpu_custom_call.1} parent=11 // pred_fallthru
          _
        // Predicated region
        $region33: #{tpu_custom_call.1} parent=11 // pred_check
          %p520 = pneg %p233
        $region34: #{tpu_custom_call.1} parent=11 // pred_check_branch
          %522 = sbr.rel (%p520) target = $region36
        $region35: #{tpu_custom_call.1} parent=11 // pred_region
          _
        $region36: #{tpu_custom_call.1} parent=11 // pred_fallthru
          _
        // Predicated region
        $region37: #{tpu_custom_call.1} parent=11 // pred_check
          %p523 = pneg %p254
        $region38: #{tpu_custom_call.1} parent=11 // pred_check_branch
          %525 = sbr.rel (%p523) target = $region40
        $region39: #{tpu_custom_call.1} parent=11 // pred_region
          _
        $region40: #{tpu_custom_call.1} parent=11 // pred_fallthru
          _
        // Predicated region
        $region41: #{tpu_custom_call.1} parent=11 // pred_check
          %p526 = pneg %p275
        $region42: #{tpu_custom_call.1} parent=11 // pred_check_branch
          %528 = sbr.rel (%p526) target = $region44
        $region43: #{tpu_custom_call.1} parent=11 // pred_region
          _
        $region44: #{tpu_custom_call.1} parent=11 // pred_fallthru
          _
        // Predicated region
        $region45: #{tpu_custom_call.1} parent=11 // pred_check
          %p529 = pneg %p296
        $region46: #{tpu_custom_call.1} parent=11 // pred_check_branch
          %531 = sbr.rel (%p529) target = $region48
        $region47: #{tpu_custom_call.1} parent=11 // pred_region
          _
        $region48: #{tpu_custom_call.1} parent=11 // pred_fallthru
          _
        // Predicated region
        $region49: #{tpu_custom_call.1} parent=11 // pred_check
          %p532 = pneg %p317
        $region50: #{tpu_custom_call.1} parent=11 // pred_check_branch
          %534 = sbr.rel (%p532) target = $region52
        $region51: #{tpu_custom_call.1} parent=11 // pred_region
          _
        $region52: #{tpu_custom_call.1} parent=11 // pred_fallthru
          _
        // Predicated region
        $region53: #{tpu_custom_call.1} parent=11 // pred_check
          %p535 = pneg %p338
        $region54: #{tpu_custom_call.1} parent=11 // pred_check_branch
          %537 = sbr.rel (%p535) target = $region56
        $region55: #{tpu_custom_call.1} parent=11 // pred_region
          _
        $region56: #{tpu_custom_call.1} parent=11 // pred_fallthru
          _
        // Predicated region
        $region57: #{tpu_custom_call.1} parent=11 // pred_check
          %p538 = pneg %p359
        $region58: #{tpu_custom_call.1} parent=11 // pred_check_branch
          %540 = sbr.rel (%p538) target = $region60
        $region59: #{tpu_custom_call.1} parent=11 // pred_region
          _
        $region60: #{tpu_custom_call.1} parent=11 // pred_fallthru
          _
        // Predicated region
        $region61: #{tpu_custom_call.1} parent=11 // pred_check
          %p541 = pneg %p380
        $region62: #{tpu_custom_call.1} parent=11 // pred_check_branch
          %543 = sbr.rel (%p541) target = $region64
        $region63: #{tpu_custom_call.1} parent=11 // pred_region
          _
        $region64: #{tpu_custom_call.1} parent=11 // pred_fallthru
          _
        // Predicated region
        $region65: #{tpu_custom_call.1} parent=11 // pred_check
          %p544 = pneg %p401
        $region66: #{tpu_custom_call.1} parent=11 // pred_check_branch
          %546 = sbr.rel (%p544) target = $region68
        $region67: #{tpu_custom_call.1} parent=11 // pred_region
          _
        $region68: #{tpu_custom_call.1} parent=11 // pred_fallthru
          _
        // Predicated region
        $region69: #{tpu_custom_call.1} parent=11 // pred_check
          %p547 = pneg %p422
        $region70: #{tpu_custom_call.1} parent=11 // pred_check_branch
          %549 = sbr.rel (%p547) target = $region72
        $region71: #{tpu_custom_call.1} parent=11 // pred_region
          _
        $region72: #{tpu_custom_call.1} parent=11 // pred_fallthru
          _
        // Predicated region
        $region73: #{tpu_custom_call.1} parent=11 // pred_check
          %p550 = pneg %p443
        $region74: #{tpu_custom_call.1} parent=11 // pred_check_branch
          %552 = sbr.rel (%p550) target = $region76
        $region75: #{tpu_custom_call.1} parent=11 // pred_region
          _
        $region76: #{tpu_custom_call.1} parent=11 // pred_fallthru
          _
        // Predicated region
        $region77: #{tpu_custom_call.1} parent=11 // pred_check
          %p553 = pneg %p464
        $region78: #{tpu_custom_call.1} parent=11 // pred_check_branch
          %555 = sbr.rel (%p553) target = $region80
        $region79: #{tpu_custom_call.1} parent=11 // pred_region
          _
        $region80: #{tpu_custom_call.1} parent=11 // pred_fallthru
          _
      $region12: #{tpu_custom_call.1} parent=5 // pred_fallthru
        _
      %p556 = scmp.lt.s32.totalorder %s29, 4
      // Predicated region
      $region81: #{tpu_custom_call.1} parent=5 // pred_check
        %p557 = pneg %p556
      $region82: #{tpu_custom_call.1} parent=5 // pred_check_branch
        %559 = sbr.rel (%p557) target = $region84
      $region83: #{tpu_custom_call.1} parent=5 // pred_region
        // Predicated region
        $region85: #{tpu_custom_call.1} parent=83 // pred_check
          %p560 = pneg %p49
        $region86: #{tpu_custom_call.1} parent=83 // pred_check_branch
          %562 = sbr.rel (%p560) target = $region88
        $region87: #{tpu_custom_call.1} parent=83 // pred_region
          %s563 = smul.u32 2, %s29
          %p564 = scmp.lt.s32.totalorder %s563, 7
          %s565 = scalar_select %p564, %s563, 7
          %s566 = smul.addr %s565, 8
          %s567 = scalar_lea.vmem %s0, %s566
          %s568 = smul.u32 2, %s29
        $region88: #{tpu_custom_call.1} parent=83 // pred_fallthru
          _
        // Predicated region
        $region89: #{tpu_custom_call.1} parent=83 // pred_check
          %p569 = pneg %p75
        $region90: #{tpu_custom_call.1} parent=83 // pred_check_branch
          %571 = sbr.rel (%p569) target = $region92
        $region91: #{tpu_custom_call.1} parent=83 // pred_region
          %s572 = sand.u32 %s65, 1
          %s573 = sand.u32 %s65, 1
          %s574 = smul.addr %s573, 48
          %s575 = scalar_lea.vmem [#allocation2], %s574
          %s576 = smul.u32 2, %s29
          %s577 = smul.addr %s576, 8
          %s578 = scalar_lea.vmem %s1, %s577
          // Predicated region
          $region93: #{tpu_custom_call.1} parent=91 // pred_check
            _
          $region94: #{tpu_custom_call.1} parent=91 // pred_check_branch
            %580 = sbr.rel (0) target = $region96
          $region95: #{tpu_custom_call.1} parent=91 // pred_region
            // Predicated region
            $region97: #{tpu_custom_call.1} parent=95 // pred_check
              _
            $region98: #{tpu_custom_call.1} parent=95 // pred_check_branch
              %582 = sbr.rel (0) target = $region100
            $region99: #{tpu_custom_call.1} parent=95 // pred_region
              // Predicated region
              $region112: #{tpu_custom_call.1} parent=99 // pred_check
                _
              $region113: #{tpu_custom_call.1} parent=99 // pred_check_branch
                %608 = sbr.rel (0) target = $region115
              $region114: #{tpu_custom_call.1} parent=99 // pred_region
                loop: start=0, step=1, limit=1
                $region116: #{tpu_custom_call.1} parent=114 // loop_pre_header
                  _
                $region117: #{tpu_custom_call.1} parent=114 // loop_header
                  %s610 = sphi 0, %s614
                  %p611 = scmp.ge.s32.totalorder %s610, 1
                  %s615 = sphi %s578, %s578
                  %s616 = sphi %s575, %s575
                $region118: #{tpu_custom_call.1} parent=114 // loop_header_branch
                  %613 = sbr.rel (%p611) target = $region122
                $region119: #{tpu_custom_call.1} parent=114 // loop_body
                  %v617 = vld [vmem:[%s615] sm:$0xff]
                  %618 = vst [vmem:[%s616] sm:$0xff] %v617
                  %v619 = vld [vmem:[%s615 + $0x8] sm:$0xff]
                  %620 = vst [vmem:[%s616 + $0x8] sm:$0xff] %v619
                  %v621 = vld [vmem:[%s615 + $0x40] sm:$0xff]
                  %622 = vst [vmem:[%s616 + $0x10] sm:$0xff] %v621
                  %v623 = vld [vmem:[%s615 + $0x48] sm:$0xff]
                  %624 = vst [vmem:[%s616 + $0x18] sm:$0xff] %v623
                  %v625 = vld [vmem:[%s615 + $0x80] sm:$0xff]
                  %626 = vst [vmem:[%s616 + $0x20] sm:$0xff] %v625
                  %v627 = vld [vmem:[%s615 + $0x88] sm:$0xff]
                  %628 = vst [vmem:[%s616 + $0x28] sm:$0xff] %v627
                $region120: #{tpu_custom_call.1} parent=114 // loop_footer
                  %s614 = sadd.s32 1, %s610
                $region121: #{tpu_custom_call.1} parent=114 // loop_footer_branch
                  %609 = sbr.rel target = $region117
                $region122: #{tpu_custom_call.1} parent=114 // loop_exit
                  _
              $region115: #{tpu_custom_call.1} parent=99 // pred_fallthru
                _
              // Predicated region
              $region123: #{tpu_custom_call.1} parent=99 // pred_check
                _
              $region124: #{tpu_custom_call.1} parent=99 // pred_check_branch
                %630 = sbr.rel target = $region126
              $region125: #{tpu_custom_call.1} parent=99 // pred_region
                _
              $region126: #{tpu_custom_call.1} parent=99 // pred_fallthru
                _
            $region100: #{tpu_custom_call.1} parent=95 // pred_fallthru
              _
            // Predicated region
            $region101: #{tpu_custom_call.1} parent=95 // pred_check
              _
            $region102: #{tpu_custom_call.1} parent=95 // pred_check_branch
              %584 = sbr.rel target = $region104
            $region103: #{tpu_custom_call.1} parent=95 // pred_region
              %s586 = ssub.s32 256, 1
              loop: start=0, step=1, limit=1
              $region105: #{tpu_custom_call.1} parent=103 // loop_pre_header
                _
              $region106: #{tpu_custom_call.1} parent=103 // loop_header
                %s588 = sphi 0, %s592
                %p589 = scmp.ge.s32.totalorder %s588, 1
                %s593 = sphi %s578, %s578
                %s594 = sphi %s575, %s575
              $region107: #{tpu_custom_call.1} parent=103 // loop_header_branch
                %591 = sbr.rel (%p589) target = $region111
              $region108: #{tpu_custom_call.1} parent=103 // loop_body
                %v595 = vld [vmem:[%s593] sm:%s586]
                %596 = vst [vmem:[%s594] sm:%s586] %v595
                %v597 = vld [vmem:[%s593 + $0x8] sm:%s586]
                %598 = vst [vmem:[%s594 + $0x8] sm:%s586] %v597
                %v599 = vld [vmem:[%s593 + $0x40] sm:%s586]
                %600 = vst [vmem:[%s594 + $0x10] sm:%s586] %v599
                %v601 = vld [vmem:[%s593 + $0x48] sm:%s586]
                %602 = vst [vmem:[%s594 + $0x18] sm:%s586] %v601
                %v603 = vld [vmem:[%s593 + $0x80] sm:%s586]
                %604 = vst [vmem:[%s594 + $0x20] sm:%s586] %v603
                %v605 = vld [vmem:[%s593 + $0x88] sm:%s586]
                %606 = vst [vmem:[%s594 + $0x28] sm:%s586] %v605
              $region109: #{tpu_custom_call.1} parent=103 // loop_footer
                %s592 = sadd.s32 1, %s588
              $region110: #{tpu_custom_call.1} parent=103 // loop_footer_branch
                %587 = sbr.rel target = $region106
              $region111: #{tpu_custom_call.1} parent=103 // loop_exit
                _
            $region104: #{tpu_custom_call.1} parent=95 // pred_fallthru
              _
          $region96: #{tpu_custom_call.1} parent=91 // pred_fallthru
            _
          %631 = vnop
        $region92: #{tpu_custom_call.1} parent=83 // pred_fallthru
          _
        // Predicated region
        $region127: #{tpu_custom_call.1} parent=83 // pred_check
          %p632 = pneg %p101
        $region128: #{tpu_custom_call.1} parent=83 // pred_check_branch
          %634 = sbr.rel (%p632) target = $region130
        $region129: #{tpu_custom_call.1} parent=83 // pred_region
          %s635 = smul.u32 2, %s29
          %p636 = scmp.lt.s32.totalorder %s635, 7
          %s637 = scalar_select %p636, %s635, 7
          %s638 = smul.addr %s637, 8
          %s639 = scalar_lea.vmem %s2, %s638
          %s640 = smul.u32 2, %s29
        $region130: #{tpu_custom_call.1} parent=83 // pred_fallthru
          _
      $region84: #{tpu_custom_call.1} parent=5 // pred_fallthru
        _
      %p641 = scmp.le.s32.totalorder 1, %s29
      %p642 = scmp.lt.s32.totalorder %s29, 5
      %p643 = pnand %p641, %p642
      %p644 = pneg %p643
      // Predicated region
      $region131: #{tpu_custom_call.1} parent=5 // pred_check
        _
      $region132: #{tpu_custom_call.1} parent=5 // pred_check_branch
        %646 = sbr.rel (%p643) target = $region134
      $region133: #{tpu_custom_call.1} parent=5 // pred_region
        %s647 = ssub.s32 %s29, 1
        %s648 = sand.u32 %s68, 1
        %s649 = sand.u32 %s68, 1
        %s650 = smul.addr %s649, 48
        %s651 = scalar_lea.vmem [#allocation2], %s650
        // Predicated region
        $region135: #{tpu_custom_call.1} parent=133 // pred_check
          %p652 = pneg %p81
        $region136: #{tpu_custom_call.1} parent=133 // pred_check_branch
          %654 = sbr.rel (%p652) target = $region138
        $region137: #{tpu_custom_call.1} parent=133 // pred_region
          _
        $region138: #{tpu_custom_call.1} parent=133 // pred_fallthru
          _
        %s655 = smul.u32 2, %s34
        %p656 = scmp.lt.s32.totalorder %s655, 7
        %s657 = scalar_select %p656, %s655, 7
        %s658 = smul.addr %s657, 8
        %s659 = scalar_lea.vmem %s0, %s658
        %p660 = pneg %p55
        %p661 = pneg %p52
        %s662 = sand.u32 %s68, 1
        %s663 = sand.u32 %s68, 1
        %s664 = smul.addr %s663, 48
        %s665 = scalar_lea.vmem [#allocation2], %s664
        %p666 = pneg %p81
        %p667 = pneg %p78
        %s668 = smul.u32 2, %s34
        %p669 = scmp.lt.s32.totalorder %s668, 7
        %s670 = scalar_select %p669, %s668, 7
        %s671 = smul.addr %s670, 8
        %s672 = scalar_lea.vmem %s2, %s671
        %p673 = pneg %p107
        %p674 = pneg %p104
        %p675 = pneg %p128
        %p676 = pneg %p125
        %p677 = pneg %p149
        %p678 = pneg %p146
        %p679 = pneg %p170
        %p680 = pneg %p167
        %p681 = pneg %p191
        %p682 = pneg %p188
        %p683 = pneg %p212
        %p684 = pneg %p209
        %p685 = pneg %p233
        %p686 = pneg %p230
        %p687 = pneg %p254
        %p688 = pneg %p251
        %p689 = pneg %p275
        %p690 = pneg %p272
        %p691 = pneg %p296
        %p692 = pneg %p293
        %p693 = pneg %p317
        %p694 = pneg %p314
        %p695 = pneg %p338
        %p696 = pneg %p335
        %p697 = pneg %p359
        %p698 = pneg %p356
        %p699 = pneg %p380
        %p700 = pneg %p377
        %p701 = pneg %p401
        %p702 = pneg %p398
        %p703 = pneg %p422
        %p704 = pneg %p419
        %p705 = pneg %p443
        %p706 = pneg %p440
        %p707 = pneg %p464
        %p708 = pneg %p461
        %p709 = pneg %p490
        %p710 = pneg %p487
        %s711 = sand.u32 %s477, 1
        %s712 = scalar_lea.sflag [#allocation4], %s711
        %s713 = sand.u32 %s477, 1
        %s714 = smul.addr %s713, 16
        %s715 = scalar_lea.vmem [#allocation3], %s714
        %s716 = smul.u32 2, %s34
        %p717 = scmp.lt.s32.totalorder %s716, 7
        %s718 = scalar_select %p717, %s716, 7
        %s719 = smul.addr %s718, 8
        %s720 = scalar_lea.vmem %s0, %s719
        %s721 = smul.u32 2, %s34
        %s722 = smul.u32 2, %s34
        %s723 = smul.u32 2, %s34
        %p724 = scmp.lt.s32.totalorder %s723, 7
        %s725 = scalar_select %p724, %s723, 7
        %s726 = smul.addr %s725, 8
        %s727 = scalar_lea.vmem %s2, %s726
        %s728 = smul.u32 2, %s34
        %s729 = smul.u32 2, %s34
        %v730 = vld [vmem:[%s720] sm:$0xff]
        %v731 = vld [vmem:[%s720 + $0x8] sm:$0xff]
        %v732 = vld [vmem:[%s3] sm:$0xff]
        %v733 = vld [vmem:[%s3 + $0x8] sm:$0xff]
        %v734 = vld [vmem:[%s3 + $0x10] sm:$0xff]
        %v735 = vld [vmem:[%s3 + $0x18] sm:$0xff]
        %v736 = vld [vmem:[%s4] sm:$0x1]
        %v738 = vperm.slane %v736, 0
        %vm740 = vcmask 261120
        %v742 = vsel %vm740, %v730, 0
        %v745 = vsel %vm740, %v731, 0
        %747 = vmatpush.msra.mxu0 0.0
        %748 = vmatpush.msra.mxu0 0.0
        %749 = vmatpush.msra.mxu0 0.0
        %750 = vmatpush.msra.mxu0 0.0
        %751 = vmatpush.msra.mxu0 0.0
        %752 = vmatpush.msra.mxu0 0.0
        %753 = vmatpush.msra.mxu0 0.0
        %754 = vmatpush.msra.mxu0 0.0
        %755 = vmatpush.msra.mxu0 0.0
        %756 = vmatpush.msra.mxu0 0.0
        %757 = vmatpush.msra.mxu0 0.0
        %758 = vmatpush.msra.mxu0 0.0
        %759 = vmatpush.msra.mxu0 %v735
        %760 = vmatpush.msra.mxu0 %v734
        %761 = vmatpush.msra.mxu0 %v733
        %762 = vmatpush.msra.mxu0 %v732
        %763 = vmatmul.f32.gmra.mxu0 %v742
        %v764 = vpop.f32.mrf.mxu0
        %v765 = vadd.f32 %v738, %v764
        %766 = vmatmul.f32.gmra.mxu0 %v745
        %v767 = vpop.f32.mrf.mxu0
        %v768 = vadd.f32 %v738, %v767
        %769 = vdwg.mxu0
        %v770 = vmax.f32 %v765, -60.0
        %v771 = vmax.f32 %v768, -60.0
        %v772 = vsub.f32 0.0, %v770
        %v773 = vsub.f32 0.0, %v771
        %v774 = vmul.f32 %v772, 1.442695
        %v775 = vpow.pop %v774
        %v776 = vmul.f32 %v773, 1.442695
        %v777 = vpow.pop %v776
        %v778 = vadd.f32 %v775, 1.0
        %v779 = vadd.f32 %v777, 1.0
        %v780 = vrcp.pop %v778
        %v781 = vrcp.pop %v779
        %v782 = vmul.f32 %v778, %v780
        %v783 = vmul.f32 %v779, %v781
        %v784 = vsub.f32 2.0, %v782
        %v785 = vsub.f32 2.0, %v783
        %v786 = vmul.f32 %v780, %v784
        %v787 = vmul.f32 %v781, %v785
        %v788 = vmul.f32 %v765, %v786
        %v789 = vmul.f32 %v768, %v787
        %v790 = vld [vmem:[%s5] sm:$0xff]
        %v791 = vld [vmem:[%s5 + $0x8] sm:$0xff]
        %v792 = vld [vmem:[%s5 + $0x10] sm:$0xff]
        %v793 = vld [vmem:[%s5 + $0x18] sm:$0xff]
        %v794 = vld [vmem:[%s6] sm:$0x1]
        %v796 = vperm.slane %v794, 0
        %v799 = vsel %vm740, %v788, 0
        %v802 = vsel %vm740, %v789, 0
        %804 = vmatpush.msra.mxu0 0.0
        %805 = vmatpush.msra.mxu0 0.0
        %806 = vmatpush.msra.mxu0 0.0
        %807 = vmatpush.msra.mxu0 0.0
        %808 = vmatpush.msra.mxu0 0.0
        %809 = vmatpush.msra.mxu0 0.0
        %810 = vmatpush.msra.mxu0 0.0
        %811 = vmatpush.msra.mxu0 0.0
        %812 = vmatpush.msra.mxu0 0.0
        %813 = vmatpush.msra.mxu0 0.0
        %814 = vmatpush.msra.mxu0 0.0
        %815 = vmatpush.msra.mxu0 0.0
        %816 = vmatpush.msra.mxu0 %v793
        %817 = vmatpush.msra.mxu0 %v792
        %818 = vmatpush.msra.mxu0 %v791
        %819 = vmatpush.msra.mxu0 %v790
        %820 = vmatmul.f32.gmra.mxu0 %v799
        %v821 = vpop.f32.mrf.mxu0
        %v822 = vadd.f32 %v796, %v821
        %823 = vmatmul.f32.gmra.mxu0 %v802
        %v824 = vpop.f32.mrf.mxu0
        %v825 = vadd.f32 %v796, %v824
        %826 = vdwg.mxu0
        %v827 = vld [vmem:[%s651] sm:$0xff]
        %v828 = vld [vmem:[%s651 + $0x8] sm:$0xff]
        %v829 = vld [vmem:[%s651 + $0x10] sm:$0xff]
        %v830 = vld [vmem:[%s651 + $0x18] sm:$0xff]
        %v831 = vld [vmem:[%s651 + $0x20] sm:$0xff]
        %v832 = vld [vmem:[%s651 + $0x28] sm:$0xff]
        %v833 = vld [vmem:[%s727] sm:$0xff]
        %v834 = vld [vmem:[%s727 + $0x8] sm:$0xff]
        %v835 = vld [vmem:[%s7] sm:$0xff]
        %v836 = vld [vmem:[%s7 + $0x8] sm:$0xff]
        %v837 = vld [vmem:[%s7 + $0x10] sm:$0xff]
        %v838 = vld [vmem:[%s7 + $0x18] sm:$0xff]
        %v840 = vsel %vm740, %v827, 0
        %v843 = vsel %vm740, %v828, 0
        %v846 = vsel %vm740, %v829, 0
        %v849 = vsel %vm740, %v830, 0
        %v852 = vsel %vm740, %v831, 0
        %v855 = vsel %vm740, %v832, 0
        %857 = vmatpush.msra.mxu0 0.0
        %858 = vmatpush.msra.mxu0 0.0
        %859 = vmatpush.msra.mxu0 0.0
        %860 = vmatpush.msra.mxu0 0.0
        %861 = vmatpush.msra.mxu0 0.0
        %862 = vmatpush.msra.mxu0 0.0
        %863 = vmatpush.msra.mxu0 0.0
        %864 = vmatpush.msra.mxu0 0.0
        %865 = vmatpush.msra.mxu0 0.0
        %866 = vmatpush.msra.mxu0 0.0
        %867 = vmatpush.msra.mxu0 0.0
        %868 = vmatpush.msra.mxu0 0.0
        %869 = vmatpush.msra.mxu0 %v838
        %870 = vmatpush.msra.mxu0 %v837
        %871 = vmatpush.msra.mxu0 %v836
        %872 = vmatpush.msra.mxu0 %v835
        %873 = vmatmul.f32.gmra.mxu0 %v840
        %v874 = vpop.f32.mrf.mxu0
        %v875 = vadd.f32 0.0, %v874
        %876 = vmatmul.f32.gmra.mxu0 %v843
        %v877 = vpop.f32.mrf.mxu0
        %v878 = vadd.f32 0.0, %v877
        %879 = vmatmul.f32.gmra.mxu0 %v846
        %v880 = vpop.f32.mrf.mxu0
        %v881 = vadd.f32 0.0, %v880
        %882 = vmatmul.f32.gmra.mxu0 %v849
        %v883 = vpop.f32.mrf.mxu0
        %v884 = vadd.f32 0.0, %v883
        %885 = vmatmul.f32.gmra.mxu0 %v852
        %v886 = vpop.f32.mrf.mxu0
        %v887 = vadd.f32 0.0, %v886
        %888 = vmatmul.f32.gmra.mxu0 %v855
        %v889 = vpop.f32.mrf.mxu0
        %v890 = vadd.f32 0.0, %v889
        %891 = vdwg.mxu0
        %v892 = vadd.f32 %v875, 1e-07
        %v893 = vadd.f32 %v878, 1e-07
        %v894 = vadd.f32 %v881, 1e-07
        %v895 = vadd.f32 %v884, 1e-07
        %v896 = vadd.f32 %v887, 1e-07
        %v897 = vadd.f32 %v890, 1e-07
        %v898 = vmul.f32 %v892, %v892
        %v899 = vmul.f32 %v893, %v893
        %v900 = vmul.f32 %v894, %v894
        %v901 = vmul.f32 %v895, %v895
        %v902 = vadd.f32 %v898, %v900
        %v903 = vadd.f32 %v899, %v901
        %v904 = vmul.f32 %v896, %v896
        %v905 = vmul.f32 %v897, %v897
        %v906 = vadd.f32 %v902, %v904
        %v907 = vadd.f32 %v903, %v905
        %v908 = vrsqrt.pop %v906
        %v909 = vmul.f32 %v908, %v906
        %v910 = vmul.f32 %v909, %v908
        %v911 = vmul.f32 0.5, %v910
        %v912 = vsub.f32 1.5, %v911
        %v913 = vmul.f32 %v908, %v912
        %v914 = vmul.f32 %v906, %v913
        %vm915 = vcmp.eq.f32.partialorder %v906, inf
        %v916 = vsel %vm915, %v906, %v914
        %vm917 = vcmp.eq.f32.partialorder %v906, 0.0
        %v918 = vand.u32 %v906, 2147483648
        %v919 = vsel %vm917, %v918, %v916
        %v920 = vrsqrt.pop %v907
        %v921 = vmul.f32 %v920, %v907
        %v922 = vmul.f32 %v921, %v920
        %v923 = vmul.f32 0.5, %v922
        %v924 = vsub.f32 1.5, %v923
        %v925 = vmul.f32 %v920, %v924
        %v926 = vmul.f32 %v907, %v925
        %vm927 = vcmp.eq.f32.partialorder %v907, inf
        %v928 = vsel %vm927, %v907, %v926
        %vm929 = vcmp.eq.f32.partialorder %v907, 0.0
        %v930 = vand.u32 %v907, 2147483648
        %v931 = vsel %vm929, %v930, %v928
        %v932 = vld [vmem:[%s8] sm:$0x1]
        %v933 = vmul.f32 %v932, %v932
        %v935 = vperm.slane %v933, 0
        %v937 = vmul.f32 %v935, %v919
        %v938 = vmul.f32 %v935, %v931
        %v939 = vadd.f32 %v937, 1.0
        %v940 = vadd.f32 %v938, 1.0
        %v941 = vrcp.pop %v939
        %v942 = vrcp.pop %v940
        %v943 = vmul.f32 %v939, %v941
        %v944 = vmul.f32 %v940, %v942
        %v945 = vsub.f32 2.0, %v943
        %v946 = vsub.f32 2.0, %v944
        %v947 = vmul.f32 %v941, %v945
        %v948 = vmul.f32 %v942, %v946
        %v949 = vmul.f32 %v875, %v947
        %v950 = vmul.f32 %v878, %v948
        %v951 = vmul.f32 %v881, %v947
        %v952 = vmul.f32 %v884, %v948
        %v953 = vmul.f32 %v887, %v947
        %v954 = vmul.f32 %v890, %v948
        %956 = vset.pattern.permute.xlu0 1
        %957 = vperm.xlu0 %956, %v833
        %v958 = vpop.permute.xlu0 %957
        %961 = vset.pattern.permute.xlu0 1
        %962 = vperm.xlu0 %961, %v834
        %v963 = vpop.permute.xlu0 %962
        %965 = vset.pattern.permute.xlu0 2
        %966 = vperm.xlu0 %965, %v833
        %v967 = vpop.permute.xlu0 %966
        %969 = vset.pattern.permute.xlu0 2
        %970 = vperm.xlu0 %969, %v834
        %v971 = vpop.permute.xlu0 %970
        %973 = vset.pattern.permute.xlu0 3
        %974 = vperm.xlu0 %973, %v833
        %v975 = vpop.permute.xlu0 %974
        %977 = vset.pattern.permute.xlu0 3
        %978 = vperm.xlu0 %977, %v834
        %v979 = vpop.permute.xlu0 %978
        %981 = vset.pattern.permute.xlu0 0
        %982 = vperm.xlu0 %981, %v833
        %v983 = vpop.permute.xlu0 %982
        %985 = vset.pattern.permute.xlu0 0
        %986 = vperm.xlu0 %985, %v834
        %v987 = vpop.permute.xlu0 %986
        %v989 = vmul.f32 %v983, %v822
        %v990 = vmul.f32 %v987, %v825
        %v991 = vmul.f32 %v958, %v949
        %v992 = vmul.f32 %v963, %v950
        %v993 = vadd.f32 %v989, %v991
        %v994 = vadd.f32 %v990, %v992
        %v995 = vmul.f32 %v967, %v951
        %v996 = vmul.f32 %v971, %v952
        %v997 = vadd.f32 %v993, %v995
        %v998 = vadd.f32 %v994, %v996
        %v999 = vmul.f32 %v975, %v953
        %v1000 = vmul.f32 %v979, %v954
        %v1001 = vadd.f32 %v997, %v999
        %v1002 = vadd.f32 %v998, %v1000
        %v1003 = vmul.f32 %v958, %v822
        %v1004 = vmul.f32 %v963, %v825
        %1005 = vset.pattern.permute.xlu0 4
        %1006 = vperm.xlu0 %1005, %v833
        %v1007 = vpop.permute.xlu0 %1006
        %1009 = vset.pattern.permute.xlu0 4
        %1010 = vperm.xlu0 %1009, %v834
        %v1011 = vpop.permute.xlu0 %1010
        %v1013 = vmul.f32 %v1007, %v949
        %v1014 = vmul.f32 %v1011, %v950
        %v1015 = vadd.f32 %v1003, %v1013
        %v1016 = vadd.f32 %v1004, %v1014
        %1017 = vset.pattern.permute.xlu0 5
        %1018 = vperm.xlu0 %1017, %v833
        %v1019 = vpop.permute.xlu0 %1018
        %1021 = vset.pattern.permute.xlu0 5
        %1022 = vperm.xlu0 %1021, %v834
        %v1023 = vpop.permute.xlu0 %1022
        %v1025 = vmul.f32 %v1019, %v951
        %v1026 = vmul.f32 %v1023, %v952
        %v1027 = vadd.f32 %v1015, %v1025
        %v1028 = vadd.f32 %v1016, %v1026
        %1029 = vset.pattern.permute.xlu0 6
        %1030 = vperm.xlu0 %1029, %v833
        %v1031 = vpop.permute.xlu0 %1030
        %1033 = vset.pattern.permute.xlu0 6
        %1034 = vperm.xlu0 %1033, %v834
        %v1035 = vpop.permute.xlu0 %1034
        %v1037 = vmul.f32 %v1031, %v953
        %v1038 = vmul.f32 %v1035, %v954
        %v1039 = vadd.f32 %v1027, %v1037
        %v1040 = vadd.f32 %v1028, %v1038
        %v1041 = vmul.f32 %v967, %v822
        %v1042 = vmul.f32 %v971, %v825
        %1043 = vset.pattern.permute.xlu0 7
        %1044 = vperm.xlu0 %1043, %v833
        %v1045 = vpop.permute.xlu0 %1044
        %1047 = vset.pattern.permute.xlu0 7
        %1048 = vperm.xlu0 %1047, %v834
        %v1049 = vpop.permute.xlu0 %1048
        %v1051 = vmul.f32 %v1045, %v949
        %v1052 = vmul.f32 %v1049, %v950
        %v1053 = vadd.f32 %v1041, %v1051
        %v1054 = vadd.f32 %v1042, %v1052
        %1055 = vset.pattern.permute.xlu0 8
        %1056 = vperm.xlu0 %1055, %v833
        %v1057 = vpop.permute.xlu0 %1056
        %1059 = vset.pattern.permute.xlu0 8
        %1060 = vperm.xlu0 %1059, %v834
        %v1061 = vpop.permute.xlu0 %1060
        %v1063 = vmul.f32 %v1057, %v951
        %v1064 = vmul.f32 %v1061, %v952
        %v1065 = vadd.f32 %v1053, %v1063
        %v1066 = vadd.f32 %v1054, %v1064
        %1067 = vset.pattern.permute.xlu0 9
        %1068 = vperm.xlu0 %1067, %v833
        %v1069 = vpop.permute.xlu0 %1068
        %1071 = vset.pattern.permute.xlu0 9
        %1072 = vperm.xlu0 %1071, %v834
        %v1073 = vpop.permute.xlu0 %1072
        %v1075 = vmul.f32 %v1069, %v953
        %v1076 = vmul.f32 %v1073, %v954
        %v1077 = vadd.f32 %v1065, %v1075
        %v1078 = vadd.f32 %v1066, %v1076
        %v1079 = vmul.f32 %v975, %v822
        %v1080 = vmul.f32 %v979, %v825
        %1081 = vset.pattern.permute.xlu0 10
        %1082 = vperm.xlu0 %1081, %v833
        %v1083 = vpop.permute.xlu0 %1082
        %1085 = vset.pattern.permute.xlu0 10
        %1086 = vperm.xlu0 %1085, %v834
        %v1087 = vpop.permute.xlu0 %1086
        %v1089 = vmul.f32 %v1083, %v949
        %v1090 = vmul.f32 %v1087, %v950
        %v1091 = vadd.f32 %v1079, %v1089
        %v1092 = vadd.f32 %v1080, %v1090
        %1093 = vset.pattern.permute.xlu0 11
        %1094 = vperm.xlu0 %1093, %v833
        %v1095 = vpop.permute.xlu0 %1094
        %1097 = vset.pattern.permute.xlu0 11
        %1098 = vperm.xlu0 %1097, %v834
        %v1099 = vpop.permute.xlu0 %1098
        %v1101 = vmul.f32 %v1095, %v951
        %v1102 = vmul.f32 %v1099, %v952
        %v1103 = vadd.f32 %v1091, %v1101
        %v1104 = vadd.f32 %v1092, %v1102
        %1105 = vset.pattern.permute.xlu0 12
        %1106 = vperm.xlu0 %1105, %v833
        %v1107 = vpop.permute.xlu0 %1106
        %1109 = vset.pattern.permute.xlu0 12
        %1110 = vperm.xlu0 %1109, %v834
        %v1111 = vpop.permute.xlu0 %1110
        %v1113 = vmul.f32 %v1107, %v953
        %v1114 = vmul.f32 %v1111, %v954
        %v1115 = vadd.f32 %v1103, %v1113
        %v1116 = vadd.f32 %v1104, %v1114
        %v1117 = vld [vmem:[%s9] sm:$0xff]
        %v1118 = vld [vmem:[%s9 + $0x8] sm:$0xff]
        %v1119 = vld [vmem:[%s9 + $0x10] sm:$0xff]
        %v1120 = vld [vmem:[%s9 + $0x18] sm:$0xff]
        %1121 = vmatpush.msra.mxu0 0.0
        %1122 = vmatpush.msra.mxu0 0.0
        %1123 = vmatpush.msra.mxu0 0.0
        %1124 = vmatpush.msra.mxu0 0.0
        %1125 = vmatpush.msra.mxu0 0.0
        %1126 = vmatpush.msra.mxu0 0.0
        %1127 = vmatpush.msra.mxu0 0.0
        %1128 = vmatpush.msra.mxu0 0.0
        %1129 = vmatpush.msra.mxu0 0.0
        %1130 = vmatpush.msra.mxu0 0.0
        %1131 = vmatpush.msra.mxu0 0.0
        %1132 = vmatpush.msra.mxu0 0.0
        %1133 = vmatpush.msra.mxu0 %v1120
        %1134 = vmatpush.msra.mxu0 %v1119
        %1135 = vmatpush.msra.mxu0 %v1118
        %1136 = vmatpush.msra.mxu0 %v1117
        %1137 = vmatmul.f32.gmra.mxu0 %v840
        %v1138 = vpop.f32.mrf.mxu0
        %v1139 = vadd.f32 0.0, %v1138
        %1140 = vmatmul.f32.gmra.mxu0 %v843
        %v1141 = vpop.f32.mrf.mxu0
        %v1142 = vadd.f32 0.0, %v1141
        %1143 = vmatmul.f32.gmra.mxu0 %v846
        %v1144 = vpop.f32.mrf.mxu0
        %v1145 = vadd.f32 0.0, %v1144
        %1146 = vmatmul.f32.gmra.mxu0 %v849
        %v1147 = vpop.f32.mrf.mxu0
        %v1148 = vadd.f32 0.0, %v1147
        %1149 = vmatmul.f32.gmra.mxu0 %v852
        %v1150 = vpop.f32.mrf.mxu0
        %v1151 = vadd.f32 0.0, %v1150
        %1152 = vmatmul.f32.gmra.mxu0 %v855
        %v1153 = vpop.f32.mrf.mxu0
        %v1154 = vadd.f32 0.0, %v1153
        %1155 = vdwg.mxu0
        %v1156 = vadd.f32 %v1139, 1e-07
        %v1157 = vadd.f32 %v1142, 1e-07
        %v1158 = vadd.f32 %v1145, 1e-07
        %v1159 = vadd.f32 %v1148, 1e-07
        %v1160 = vadd.f32 %v1151, 1e-07
        %v1161 = vadd.f32 %v1154, 1e-07
        %v1162 = vmul.f32 %v1156, %v1156
        %v1163 = vmul.f32 %v1157, %v1157
        %v1164 = vmul.f32 %v1158, %v1158
        %v1165 = vmul.f32 %v1159, %v1159
        %v1166 = vadd.f32 %v1162, %v1164
        %v1167 = vadd.f32 %v1163, %v1165
        %v1168 = vmul.f32 %v1160, %v1160
        %v1169 = vmul.f32 %v1161, %v1161
        %v1170 = vadd.f32 %v1166, %v1168
        %v1171 = vadd.f32 %v1167, %v1169
        %v1172 = vrsqrt.pop %v1170
        %v1173 = vmul.f32 %v1172, %v1170
        %v1174 = vmul.f32 %v1173, %v1172
        %v1175 = vmul.f32 0.5, %v1174
        %v1176 = vsub.f32 1.5, %v1175
        %v1177 = vmul.f32 %v1172, %v1176
        %v1178 = vmul.f32 %v1170, %v1177
        %vm1179 = vcmp.eq.f32.partialorder %v1170, inf
        %v1180 = vsel %vm1179, %v1170, %v1178
        %vm1181 = vcmp.eq.f32.partialorder %v1170, 0.0
        %v1182 = vand.u32 %v1170, 2147483648
        %v1183 = vsel %vm1181, %v1182, %v1180
        %v1184 = vrsqrt.pop %v1171
        %v1185 = vmul.f32 %v1184, %v1171
        %v1186 = vmul.f32 %v1185, %v1184
        %v1187 = vmul.f32 0.5, %v1186
        %v1188 = vsub.f32 1.5, %v1187
        %v1189 = vmul.f32 %v1184, %v1188
        %v1190 = vmul.f32 %v1171, %v1189
        %vm1191 = vcmp.eq.f32.partialorder %v1171, inf
        %v1192 = vsel %vm1191, %v1171, %v1190
        %vm1193 = vcmp.eq.f32.partialorder %v1171, 0.0
        %v1194 = vand.u32 %v1171, 2147483648
        %v1195 = vsel %vm1193, %v1194, %v1192
        %v1196 = vld [vmem:[%s10] sm:$0x1]
        %v1197 = vmul.f32 %v1196, %v1196
        %v1199 = vperm.slane %v1197, 0
        %v1201 = vmul.f32 %v1199, %v1183
        %v1202 = vmul.f32 %v1199, %v1195
        %v1203 = vadd.f32 %v1201, 1.0
        %v1204 = vadd.f32 %v1202, 1.0
        %v1205 = vrcp.pop %v1203
        %v1206 = vrcp.pop %v1204
        %v1207 = vmul.f32 %v1203, %v1205
        %v1208 = vmul.f32 %v1204, %v1206
        %v1209 = vsub.f32 2.0, %v1207
        %v1210 = vsub.f32 2.0, %v1208
        %v1211 = vmul.f32 %v1205, %v1209
        %v1212 = vmul.f32 %v1206, %v1210
        %v1213 = vmul.f32 %v1139, %v1211
        %v1214 = vmul.f32 %v1142, %v1212
        %v1215 = vmul.f32 %v1145, %v1211
        %v1216 = vmul.f32 %v1148, %v1212
        %v1217 = vmul.f32 %v1151, %v1211
        %v1218 = vmul.f32 %v1154, %v1212
        %v1219 = vld [vmem:[%s11] sm:$0xff]
        %v1220 = vld [vmem:[%s11 + $0x8] sm:$0xff]
        %v1221 = vld [vmem:[%s11 + $0x10] sm:$0xff]
        %v1222 = vld [vmem:[%s11 + $0x18] sm:$0xff]
        %1223 = vmatpush.msra.mxu0 0.0
        %1224 = vmatpush.msra.mxu0 0.0
        %1225 = vmatpush.msra.mxu0 0.0
        %1226 = vmatpush.msra.mxu0 0.0
        %1227 = vmatpush.msra.mxu0 0.0
        %1228 = vmatpush.msra.mxu0 0.0
        %1229 = vmatpush.msra.mxu0 0.0
        %1230 = vmatpush.msra.mxu0 0.0
        %1231 = vmatpush.msra.mxu0 0.0
        %1232 = vmatpush.msra.mxu0 0.0
        %1233 = vmatpush.msra.mxu0 0.0
        %1234 = vmatpush.msra.mxu0 0.0
        %1235 = vmatpush.msra.mxu0 %v1222
        %1236 = vmatpush.msra.mxu0 %v1221
        %1237 = vmatpush.msra.mxu0 %v1220
        %1238 = vmatpush.msra.mxu0 %v1219
        %1239 = vmatmul.f32.gmra.mxu0 %v840
        %v1240 = vpop.f32.mrf.mxu0
        %v1241 = vadd.f32 0.0, %v1240
        %1242 = vmatmul.f32.gmra.mxu0 %v843
        %v1243 = vpop.f32.mrf.mxu0
        %v1244 = vadd.f32 0.0, %v1243
        %1245 = vmatmul.f32.gmra.mxu0 %v846
        %v1246 = vpop.f32.mrf.mxu0
        %v1247 = vadd.f32 0.0, %v1246
        %1248 = vmatmul.f32.gmra.mxu0 %v849
        %v1249 = vpop.f32.mrf.mxu0
        %v1250 = vadd.f32 0.0, %v1249
        %1251 = vmatmul.f32.gmra.mxu0 %v852
        %v1252 = vpop.f32.mrf.mxu0
        %v1253 = vadd.f32 0.0, %v1252
        %1254 = vmatmul.f32.gmra.mxu0 %v855
        %v1255 = vpop.f32.mrf.mxu0
        %v1256 = vadd.f32 0.0, %v1255
        %1257 = vdwg.mxu0
        %v1258 = vadd.f32 %v1241, 1e-07
        %v1259 = vadd.f32 %v1244, 1e-07
        %v1260 = vadd.f32 %v1247, 1e-07
        %v1261 = vadd.f32 %v1250, 1e-07
        %v1262 = vadd.f32 %v1253, 1e-07
        %v1263 = vadd.f32 %v1256, 1e-07
        %v1264 = vmul.f32 %v1258, %v1258
        %v1265 = vmul.f32 %v1259, %v1259
        %v1266 = vmul.f32 %v1260, %v1260
        %v1267 = vmul.f32 %v1261, %v1261
        %v1268 = vadd.f32 %v1264, %v1266
        %v1269 = vadd.f32 %v1265, %v1267
        %v1270 = vmul.f32 %v1262, %v1262
        %v1271 = vmul.f32 %v1263, %v1263
        %v1272 = vadd.f32 %v1268, %v1270
        %v1273 = vadd.f32 %v1269, %v1271
        %v1274 = vrsqrt.pop %v1272
        %v1275 = vmul.f32 %v1274, %v1272
        %v1276 = vmul.f32 %v1275, %v1274
        %v1277 = vmul.f32 0.5, %v1276
        %v1278 = vsub.f32 1.5, %v1277
        %v1279 = vmul.f32 %v1274, %v1278
        %v1280 = vmul.f32 %v1272, %v1279
        %vm1281 = vcmp.eq.f32.partialorder %v1272, inf
        %v1282 = vsel %vm1281, %v1272, %v1280
        %vm1283 = vcmp.eq.f32.partialorder %v1272, 0.0
        %v1284 = vand.u32 %v1272, 2147483648
        %v1285 = vsel %vm1283, %v1284, %v1282
        %v1286 = vrsqrt.pop %v1273
        %v1287 = vmul.f32 %v1286, %v1273
        %v1288 = vmul.f32 %v1287, %v1286
        %v1289 = vmul.f32 0.5, %v1288
        %v1290 = vsub.f32 1.5, %v1289
        %v1291 = vmul.f32 %v1286, %v1290
        %v1292 = vmul.f32 %v1273, %v1291
        %vm1293 = vcmp.eq.f32.partialorder %v1273, inf
        %v1294 = vsel %vm1293, %v1273, %v1292
        %vm1295 = vcmp.eq.f32.partialorder %v1273, 0.0
        %v1296 = vand.u32 %v1273, 2147483648
        %v1297 = vsel %vm1295, %v1296, %v1294
        %v1298 = vld [vmem:[%s12] sm:$0x1]
        %v1299 = vmul.f32 %v1298, %v1298
        %v1301 = vperm.slane %v1299, 0
        %v1303 = vmul.f32 %v1301, %v1285
        %v1304 = vmul.f32 %v1301, %v1297
        %v1305 = vadd.f32 %v1303, 1.0
        %v1306 = vadd.f32 %v1304, 1.0
        %v1307 = vrcp.pop %v1305
        %v1308 = vrcp.pop %v1306
        %v1309 = vmul.f32 %v1305, %v1307
        %v1310 = vmul.f32 %v1306, %v1308
        %v1311 = vsub.f32 2.0, %v1309
        %v1312 = vsub.f32 2.0, %v1310
        %v1313 = vmul.f32 %v1307, %v1311
        %v1314 = vmul.f32 %v1308, %v1312
        %v1315 = vmul.f32 %v1241, %v1313
        %v1316 = vmul.f32 %v1244, %v1314
        %v1317 = vmul.f32 %v1247, %v1313
        %v1318 = vmul.f32 %v1250, %v1314
        %v1319 = vmul.f32 %v1253, %v1313
        %v1320 = vmul.f32 %v1256, %v1314
        %v1321 = vmul.f32 %v1213, %v1213
        %v1322 = vmul.f32 %v1214, %v1214
        %v1323 = vmul.f32 %v1315, %v1315
        %v1324 = vmul.f32 %v1316, %v1316
        %1325 = vset.pattern.permute.xlu0 13
        %1326 = vperm.xlu0 %1325, %v833
        %v1327 = vpop.permute.xlu0 %1326
        %1329 = vset.pattern.permute.xlu0 13
        %1330 = vperm.xlu0 %1329, %v834
        %v1331 = vpop.permute.xlu0 %1330
        %v1333 = vmul.f32 %v1327, %v1321
        %v1334 = vmul.f32 %v1331, %v1322
        %v1335 = vadd.f32 %v1001, %v1333
        %v1336 = vadd.f32 %v1002, %v1334
        %1337 = vset.pattern.permute.xlu0 19
        %1338 = vperm.xlu0 %1337, %v833
        %v1339 = vpop.permute.xlu0 %1338
        %1341 = vset.pattern.permute.xlu0 19
        %1342 = vperm.xlu0 %1341, %v834
        %v1343 = vpop.permute.xlu0 %1342
        %v1345 = vmul.f32 %v1339, %v1321
        %v1346 = vmul.f32 %v1343, %v1322
        %v1347 = vadd.f32 %v1039, %v1345
        %v1348 = vadd.f32 %v1040, %v1346
        %v1349 = vmul.f32 %v1339, %v1323
        %v1350 = vmul.f32 %v1343, %v1324
        %1351 = vset.pattern.permute.xlu0 20
        %1352 = vperm.xlu0 %1351, %v833
        %v1353 = vpop.permute.xlu0 %1352
        %1355 = vset.pattern.permute.xlu0 20
        %1356 = vperm.xlu0 %1355, %v834
        %v1357 = vpop.permute.xlu0 %1356
        %v1359 = vmul.f32 %v1353, %v1321
        %v1360 = vmul.f32 %v1357, %v1322
        %v1361 = vadd.f32 %v1077, %v1359
        %v1362 = vadd.f32 %v1078, %v1360
        %v1363 = vmul.f32 %v1353, %v1323
        %v1364 = vmul.f32 %v1357, %v1324
        %1365 = vset.pattern.permute.xlu0 21
        %1366 = vperm.xlu0 %1365, %v833
        %v1367 = vpop.permute.xlu0 %1366
        %1369 = vset.pattern.permute.xlu0 21
        %1370 = vperm.xlu0 %1369, %v834
        %v1371 = vpop.permute.xlu0 %1370
        %v1373 = vmul.f32 %v1367, %v1321
        %v1374 = vmul.f32 %v1371, %v1322
        %v1375 = vadd.f32 %v1115, %v1373
        %v1376 = vadd.f32 %v1116, %v1374
        %v1377 = vmul.f32 %v1367, %v1323
        %v1378 = vmul.f32 %v1371, %v1324
        %v1379 = vmul.f32 %v1213, %v1215
        %v1380 = vmul.f32 %v1214, %v1216
        %v1381 = vmul.f32 %v1315, %v1317
        %v1382 = vmul.f32 %v1316, %v1318
        %1383 = vset.pattern.permute.xlu0 14
        %1384 = vperm.xlu0 %1383, %v833
        %v1385 = vpop.permute.xlu0 %1384
        %1387 = vset.pattern.permute.xlu0 14
        %1388 = vperm.xlu0 %1387, %v834
        %v1389 = vpop.permute.xlu0 %1388
        %v1391 = vmul.f32 %v1385, %v1379
        %v1392 = vmul.f32 %v1389, %v1380
        %v1393 = vadd.f32 %v1335, %v1391
        %v1394 = vadd.f32 %v1336, %v1392
        %1395 = vset.pattern.permute.xlu0 22
        %1396 = vperm.xlu0 %1395, %v833
        %v1397 = vpop.permute.xlu0 %1396
        %1399 = vset.pattern.permute.xlu0 22
        %1400 = vperm.xlu0 %1399, %v834
        %v1401 = vpop.permute.xlu0 %1400
        %v1403 = vmul.f32 %v1397, %v1379
        %v1404 = vmul.f32 %v1401, %v1380
        %v1405 = vadd.f32 %v1347, %v1403
        %v1406 = vadd.f32 %v1348, %v1404
        %v1407 = vmul.f32 %v1397, %v1381
        %v1408 = vmul.f32 %v1401, %v1382
        %v1409 = vadd.f32 %v1349, %v1407
        %v1410 = vadd.f32 %v1350, %v1408
        %1411 = vset.pattern.permute.xlu0 23
        %1412 = vperm.xlu0 %1411, %v833
        %v1413 = vpop.permute.xlu0 %1412
        %1415 = vset.pattern.permute.xlu0 23
        %1416 = vperm.xlu0 %1415, %v834
        %v1417 = vpop.permute.xlu0 %1416
        %v1419 = vmul.f32 %v1413, %v1379
        %v1420 = vmul.f32 %v1417, %v1380
        %v1421 = vadd.f32 %v1361, %v1419
        %v1422 = vadd.f32 %v1362, %v1420
        %v1423 = vmul.f32 %v1413, %v1381
        %v1424 = vmul.f32 %v1417, %v1382
        %v1425 = vadd.f32 %v1363, %v1423
        %v1426 = vadd.f32 %v1364, %v1424
        %1427 = vset.pattern.permute.xlu0 24
        %1428 = vperm.xlu0 %1427, %v833
        %v1429 = vpop.permute.xlu0 %1428
        %1431 = vset.pattern.permute.xlu0 24
        %1432 = vperm.xlu0 %1431, %v834
        %v1433 = vpop.permute.xlu0 %1432
        %v1435 = vmul.f32 %v1429, %v1379
        %v1436 = vmul.f32 %v1433, %v1380
        %v1437 = vadd.f32 %v1375, %v1435
        %v1438 = vadd.f32 %v1376, %v1436
        %v1439 = vmul.f32 %v1429, %v1381
        %v1440 = vmul.f32 %v1433, %v1382
        %v1441 = vadd.f32 %v1377, %v1439
        %v1442 = vadd.f32 %v1378, %v1440
        %v1443 = vmul.f32 %v1213, %v1217
        %v1444 = vmul.f32 %v1214, %v1218
        %v1445 = vmul.f32 %v1315, %v1319
        %v1446 = vmul.f32 %v1316, %v1320
        %1447 = vset.pattern.permute.xlu0 15
        %1448 = vperm.xlu0 %1447, %v833
        %v1449 = vpop.permute.xlu0 %1448
        %1451 = vset.pattern.permute.xlu0 15
        %1452 = vperm.xlu0 %1451, %v834
        %v1453 = vpop.permute.xlu0 %1452
        %v1455 = vmul.f32 %v1449, %v1443
        %v1456 = vmul.f32 %v1453, %v1444
        %v1457 = vadd.f32 %v1393, %v1455
        %v1458 = vadd.f32 %v1394, %v1456
        %1459 = vset.pattern.permute.xlu0 25
        %1460 = vperm.xlu0 %1459, %v833
        %v1461 = vpop.permute.xlu0 %1460
        %1463 = vset.pattern.permute.xlu0 25
        %1464 = vperm.xlu0 %1463, %v834
        %v1465 = vpop.permute.xlu0 %1464
        %v1467 = vmul.f32 %v1461, %v1443
        %v1468 = vmul.f32 %v1465, %v1444
        %v1469 = vadd.f32 %v1405, %v1467
        %v1470 = vadd.f32 %v1406, %v1468
        %v1471 = vmul.f32 %v1461, %v1445
        %v1472 = vmul.f32 %v1465, %v1446
        %v1473 = vadd.f32 %v1409, %v1471
        %v1474 = vadd.f32 %v1410, %v1472
        %1475 = vset.pattern.permute.xlu0 26
        %1476 = vperm.xlu0 %1475, %v833
        %v1477 = vpop.permute.xlu0 %1476
        %1479 = vset.pattern.permute.xlu0 26
        %1480 = vperm.xlu0 %1479, %v834
        %v1481 = vpop.permute.xlu0 %1480
        %v1483 = vmul.f32 %v1477, %v1443
        %v1484 = vmul.f32 %v1481, %v1444
        %v1485 = vadd.f32 %v1421, %v1483
        %v1486 = vadd.f32 %v1422, %v1484
        %v1487 = vmul.f32 %v1477, %v1445
        %v1488 = vmul.f32 %v1481, %v1446
        %v1489 = vadd.f32 %v1425, %v1487
        %v1490 = vadd.f32 %v1426, %v1488
        %1491 = vset.pattern.permute.xlu0 27
        %1492 = vperm.xlu0 %1491, %v833
        %v1493 = vpop.permute.xlu0 %1492
        %1495 = vset.pattern.permute.xlu0 27
        %1496 = vperm.xlu0 %1495, %v834
        %v1497 = vpop.permute.xlu0 %1496
        %v1499 = vmul.f32 %v1493, %v1443
        %v1500 = vmul.f32 %v1497, %v1444
        %v1501 = vadd.f32 %v1437, %v1499
        %v1502 = vadd.f32 %v1438, %v1500
        %v1503 = vmul.f32 %v1493, %v1445
        %v1504 = vmul.f32 %v1497, %v1446
        %v1505 = vadd.f32 %v1441, %v1503
        %v1506 = vadd.f32 %v1442, %v1504
        %v1507 = vmul.f32 %v1215, %v1215
        %v1508 = vmul.f32 %v1216, %v1216
        %v1509 = vmul.f32 %v1317, %v1317
        %v1510 = vmul.f32 %v1318, %v1318
        %1511 = vset.pattern.permute.xlu0 16
        %1512 = vperm.xlu0 %1511, %v833
        %v1513 = vpop.permute.xlu0 %1512
        %1515 = vset.pattern.permute.xlu0 16
        %1516 = vperm.xlu0 %1515, %v834
        %v1517 = vpop.permute.xlu0 %1516
        %v1519 = vmul.f32 %v1513, %v1507
        %v1520 = vmul.f32 %v1517, %v1508
        %v1521 = vadd.f32 %v1457, %v1519
        %v1522 = vadd.f32 %v1458, %v1520
        %1523 = vset.pattern.permute.xlu0 28
        %1524 = vperm.xlu0 %1523, %v833
        %v1525 = vpop.permute.xlu0 %1524
        %1527 = vset.pattern.permute.xlu0 28
        %1528 = vperm.xlu0 %1527, %v834
        %v1529 = vpop.permute.xlu0 %1528
        %v1531 = vmul.f32 %v1525, %v1507
        %v1532 = vmul.f32 %v1529, %v1508
        %v1533 = vadd.f32 %v1469, %v1531
        %v1534 = vadd.f32 %v1470, %v1532
        %v1535 = vmul.f32 %v1525, %v1509
        %v1536 = vmul.f32 %v1529, %v1510
        %v1537 = vadd.f32 %v1473, %v1535
        %v1538 = vadd.f32 %v1474, %v1536
        %1539 = vset.pattern.permute.xlu0 29
        %1540 = vperm.xlu0 %1539, %v833
        %v1541 = vpop.permute.xlu0 %1540
        %1543 = vset.pattern.permute.xlu0 29
        %1544 = vperm.xlu0 %1543, %v834
        %v1545 = vpop.permute.xlu0 %1544
        %v1547 = vmul.f32 %v1541, %v1507
        %v1548 = vmul.f32 %v1545, %v1508
        %v1549 = vadd.f32 %v1485, %v1547
        %v1550 = vadd.f32 %v1486, %v1548
        %v1551 = vmul.f32 %v1541, %v1509
        %v1552 = vmul.f32 %v1545, %v1510
        %v1553 = vadd.f32 %v1489, %v1551
        %v1554 = vadd.f32 %v1490, %v1552
        %1555 = vset.pattern.permute.xlu0 30
        %1556 = vperm.xlu0 %1555, %v833
        %v1557 = vpop.permute.xlu0 %1556
        %1559 = vset.pattern.permute.xlu0 30
        %1560 = vperm.xlu0 %1559, %v834
        %v1561 = vpop.permute.xlu0 %1560
        %v1563 = vmul.f32 %v1557, %v1507
        %v1564 = vmul.f32 %v1561, %v1508
        %v1565 = vadd.f32 %v1501, %v1563
        %v1566 = vadd.f32 %v1502, %v1564
        %v1567 = vmul.f32 %v1557, %v1509
        %v1568 = vmul.f32 %v1561, %v1510
        %v1569 = vadd.f32 %v1505, %v1567
        %v1570 = vadd.f32 %v1506, %v1568
        %v1571 = vmul.f32 %v1215, %v1217
        %v1572 = vmul.f32 %v1216, %v1218
        %v1573 = vmul.f32 %v1317, %v1319
        %v1574 = vmul.f32 %v1318, %v1320
        %1575 = vset.pattern.permute.xlu0 17
        %1576 = vperm.xlu0 %1575, %v833
        %v1577 = vpop.permute.xlu0 %1576
        %1579 = vset.pattern.permute.xlu0 17
        %1580 = vperm.xlu0 %1579, %v834
        %v1581 = vpop.permute.xlu0 %1580
        %v1583 = vmul.f32 %v1577, %v1571
        %v1584 = vmul.f32 %v1581, %v1572
        %v1585 = vadd.f32 %v1521, %v1583
        %v1586 = vadd.f32 %v1522, %v1584
        %1587 = vset.pattern.permute.xlu0 31
        %1588 = vperm.xlu0 %1587, %v833
        %v1589 = vpop.permute.xlu0 %1588
        %1591 = vset.pattern.permute.xlu0 31
        %1592 = vperm.xlu0 %1591, %v834
        %v1593 = vpop.permute.xlu0 %1592
        %v1595 = vmul.f32 %v1589, %v1571
        %v1596 = vmul.f32 %v1593, %v1572
        %v1597 = vadd.f32 %v1533, %v1595
        %v1598 = vadd.f32 %v1534, %v1596
        %v1599 = vmul.f32 %v1589, %v1573
        %v1600 = vmul.f32 %v1593, %v1574
        %v1601 = vadd.f32 %v1537, %v1599
        %v1602 = vadd.f32 %v1538, %v1600
        %1603 = vset.pattern.permute.xlu0 32
        %1604 = vperm.xlu0 %1603, %v833
        %v1605 = vpop.permute.xlu0 %1604
        %1607 = vset.pattern.permute.xlu0 32
        %1608 = vperm.xlu0 %1607, %v834
        %v1609 = vpop.permute.xlu0 %1608
        %v1611 = vmul.f32 %v1605, %v1571
        %v1612 = vmul.f32 %v1609, %v1572
        %v1613 = vadd.f32 %v1549, %v1611
        %v1614 = vadd.f32 %v1550, %v1612
        %v1615 = vmul.f32 %v1605, %v1573
        %v1616 = vmul.f32 %v1609, %v1574
        %v1617 = vadd.f32 %v1553, %v1615
        %v1618 = vadd.f32 %v1554, %v1616
        %1619 = vset.pattern.permute.xlu0 33
        %1620 = vperm.xlu0 %1619, %v833
        %v1621 = vpop.permute.xlu0 %1620
        %1623 = vset.pattern.permute.xlu0 33
        %1624 = vperm.xlu0 %1623, %v834
        %v1625 = vpop.permute.xlu0 %1624
        %v1627 = vmul.f32 %v1621, %v1571
        %v1628 = vmul.f32 %v1625, %v1572
        %v1629 = vadd.f32 %v1565, %v1627
        %v1630 = vadd.f32 %v1566, %v1628
        %v1631 = vmul.f32 %v1621, %v1573
        %v1632 = vmul.f32 %v1625, %v1574
        %v1633 = vadd.f32 %v1569, %v1631
        %v1634 = vadd.f32 %v1570, %v1632
        %v1635 = vmul.f32 %v1217, %v1217
        %v1636 = vmul.f32 %v1218, %v1218
        %v1637 = vmul.f32 %v1319, %v1319
        %v1638 = vmul.f32 %v1320, %v1320
        %1639 = vset.pattern.permute.xlu0 18
        %1640 = vperm.xlu0 %1639, %v833
        %v1641 = vpop.permute.xlu0 %1640
        %1643 = vset.pattern.permute.xlu0 18
        %1644 = vperm.xlu0 %1643, %v834
        %v1645 = vpop.permute.xlu0 %1644
        %v1647 = vmul.f32 %v1641, %v1635
        %v1648 = vmul.f32 %v1645, %v1636
        %v1649 = vadd.f32 %v1585, %v1647
        %v1650 = vadd.f32 %v1586, %v1648
        %1651 = vset.pattern.permute.xlu0 34
        %1652 = vperm.xlu0 %1651, %v833
        %v1653 = vpop.permute.xlu0 %1652
        %1655 = vset.pattern.permute.xlu0 34
        %1656 = vperm.xlu0 %1655, %v834
        %v1657 = vpop.permute.xlu0 %1656
        %v1659 = vmul.f32 %v1653, %v1635
        %v1660 = vmul.f32 %v1657, %v1636
        %v1661 = vadd.f32 %v1597, %v1659
        %v1662 = vadd.f32 %v1598, %v1660
        %v1663 = vmul.f32 %v1653, %v1637
        %v1664 = vmul.f32 %v1657, %v1638
        %v1665 = vadd.f32 %v1601, %v1663
        %v1666 = vadd.f32 %v1602, %v1664
        %1667 = vset.pattern.permute.xlu0 35
        %1668 = vperm.xlu0 %1667, %v833
        %v1669 = vpop.permute.xlu0 %1668
        %1671 = vset.pattern.permute.xlu0 35
        %1672 = vperm.xlu0 %1671, %v834
        %v1673 = vpop.permute.xlu0 %1672
        %v1675 = vmul.f32 %v1669, %v1635
        %v1676 = vmul.f32 %v1673, %v1636
        %v1677 = vadd.f32 %v1613, %v1675
        %v1678 = vadd.f32 %v1614, %v1676
        %v1679 = vmul.f32 %v1669, %v1637
        %v1680 = vmul.f32 %v1673, %v1638
        %v1681 = vadd.f32 %v1617, %v1679
        %v1682 = vadd.f32 %v1618, %v1680
        %1683 = vset.pattern.permute.xlu0 36
        %1684 = vperm.xlu0 %1683, %v833
        %v1685 = vpop.permute.xlu0 %1684
        %1687 = vset.pattern.permute.xlu0 36
        %1688 = vperm.xlu0 %1687, %v834
        %v1689 = vpop.permute.xlu0 %1688
        %v1691 = vmul.f32 %v1685, %v1635
        %v1692 = vmul.f32 %v1689, %v1636
        %v1693 = vadd.f32 %v1629, %v1691
        %v1694 = vadd.f32 %v1630, %v1692
        %v1695 = vmul.f32 %v1685, %v1637
        %v1696 = vmul.f32 %v1689, %v1638
        %v1697 = vadd.f32 %v1633, %v1695
        %v1698 = vadd.f32 %v1634, %v1696
        %v1699 = vmul.f32 %v1315, %v1665
        %v1700 = vmul.f32 %v1316, %v1666
        %v1701 = vadd.f32 %v1649, %v1699
        %v1702 = vadd.f32 %v1650, %v1700
        %v1703 = vmul.f32 %v1317, %v1681
        %v1704 = vmul.f32 %v1318, %v1682
        %v1705 = vadd.f32 %v1701, %v1703
        %v1706 = vadd.f32 %v1702, %v1704
        %v1707 = vmul.f32 %v1319, %v1697
        %v1708 = vmul.f32 %v1320, %v1698
        %v1709 = vadd.f32 %v1705, %v1707
        %v1710 = vadd.f32 %v1706, %v1708
        %v1711 = vld [vmem:[%s13] sm:$0xff]
        %v1712 = vld [vmem:[%s13 + $0x8] sm:$0xff]
        %v1713 = vld [vmem:[%s13 + $0x10] sm:$0xff]
        %v1714 = vld [vmem:[%s13 + $0x18] sm:$0xff]
        %v1715 = vld [vmem:[%s14] sm:$0x1]
        %v1717 = vperm.slane %v1715, 0
        %v1720 = vsel %vm740, %v1709, 0
        %v1723 = vsel %vm740, %v1710, 0
        %1725 = vmatpush.msra.mxu0 0.0
        %1726 = vmatpush.msra.mxu0 0.0
        %1727 = vmatpush.msra.mxu0 0.0
        %1728 = vmatpush.msra.mxu0 0.0
        %1729 = vmatpush.msra.mxu0 0.0
        %1730 = vmatpush.msra.mxu0 0.0
        %1731 = vmatpush.msra.mxu0 0.0
        %1732 = vmatpush.msra.mxu0 0.0
        %1733 = vmatpush.msra.mxu0 0.0
        %1734 = vmatpush.msra.mxu0 0.0
        %1735 = vmatpush.msra.mxu0 0.0
        %1736 = vmatpush.msra.mxu0 0.0
        %1737 = vmatpush.msra.mxu0 %v1714
        %1738 = vmatpush.msra.mxu0 %v1713
        %1739 = vmatpush.msra.mxu0 %v1712
        %1740 = vmatpush.msra.mxu0 %v1711
        %1741 = vmatmul.f32.gmra.mxu0 %v1720
        %v1742 = vpop.f32.mrf.mxu0
        %v1743 = vadd.f32 %v1717, %v1742
        %1744 = vmatmul.f32.gmra.mxu0 %v1723
        %v1745 = vpop.f32.mrf.mxu0
        %v1746 = vadd.f32 %v1717, %v1745
        %1747 = vdwg.mxu0
        %v1748 = vmax.f32 %v1743, -60.0
        %v1749 = vmax.f32 %v1746, -60.0
        %v1750 = vsub.f32 0.0, %v1748
        %v1751 = vsub.f32 0.0, %v1749
        %v1752 = vmul.f32 %v1750, 1.442695
        %v1753 = vpow.pop %v1752
        %v1754 = vmul.f32 %v1751, 1.442695
        %v1755 = vpow.pop %v1754
        %v1756 = vadd.f32 %v1753, 1.0
        %v1757 = vadd.f32 %v1755, 1.0
        %v1758 = vrcp.pop %v1756
        %v1759 = vrcp.pop %v1757
        %v1760 = vmul.f32 %v1756, %v1758
        %v1761 = vmul.f32 %v1757, %v1759
        %v1762 = vsub.f32 2.0, %v1760
        %v1763 = vsub.f32 2.0, %v1761
        %v1764 = vmul.f32 %v1758, %v1762
        %v1765 = vmul.f32 %v1759, %v1763
        %v1766 = vmul.f32 %v1743, %v1764
        %v1767 = vmul.f32 %v1746, %v1765
        %v1768 = vld [vmem:[%s15] sm:$0xff]
        %v1769 = vld [vmem:[%s15 + $0x8] sm:$0xff]
        %v1770 = vld [vmem:[%s15 + $0x10] sm:$0xff]
        %v1771 = vld [vmem:[%s15 + $0x18] sm:$0xff]
        %v1772 = vld [vmem:[%s16] sm:$0x1]
        %v1774 = vperm.slane %v1772, 0
        %v1777 = vsel %vm740, %v1766, 0
        %v1780 = vsel %vm740, %v1767, 0
        %1782 = vmatpush.msra.mxu0 0.0
        %1783 = vmatpush.msra.mxu0 0.0
        %1784 = vmatpush.msra.mxu0 0.0
        %1785 = vmatpush.msra.mxu0 0.0
        %1786 = vmatpush.msra.mxu0 0.0
        %1787 = vmatpush.msra.mxu0 0.0
        %1788 = vmatpush.msra.mxu0 0.0
        %1789 = vmatpush.msra.mxu0 0.0
        %1790 = vmatpush.msra.mxu0 0.0
        %1791 = vmatpush.msra.mxu0 0.0
        %1792 = vmatpush.msra.mxu0 0.0
        %1793 = vmatpush.msra.mxu0 0.0
        %1794 = vmatpush.msra.mxu0 %v1771
        %1795 = vmatpush.msra.mxu0 %v1770
        %1796 = vmatpush.msra.mxu0 %v1769
        %1797 = vmatpush.msra.mxu0 %v1768
        %1798 = vmatmul.f32.gmra.mxu0 %v1777
        %v1799 = vpop.f32.mrf.mxu0
        %v1800 = vadd.f32 %v1774, %v1799
        %1801 = vmatmul.f32.gmra.mxu0 %v1780
        %v1802 = vpop.f32.mrf.mxu0
        %v1803 = vadd.f32 %v1774, %v1802
        %1804 = vdwg.mxu0
        %v1805 = vld [vmem:[%s17] sm:$0xff]
        %v1806 = vld [vmem:[%s17 + $0x8] sm:$0xff]
        %v1807 = vld [vmem:[%s17 + $0x10] sm:$0xff]
        %v1808 = vld [vmem:[%s17 + $0x18] sm:$0xff]
        %v1810 = vsel %vm740, %v1661, 0
        %v1813 = vsel %vm740, %v1662, 0
        %1815 = vmatpush.msra.mxu0 0.0
        %1816 = vmatpush.msra.mxu0 0.0
        %1817 = vmatpush.msra.mxu0 0.0
        %1818 = vmatpush.msra.mxu0 0.0
        %1819 = vmatpush.msra.mxu0 0.0
        %1820 = vmatpush.msra.mxu0 0.0
        %1821 = vmatpush.msra.mxu0 0.0
        %1822 = vmatpush.msra.mxu0 0.0
        %1823 = vmatpush.msra.mxu0 0.0
        %1824 = vmatpush.msra.mxu0 0.0
        %1825 = vmatpush.msra.mxu0 0.0
        %1826 = vmatpush.msra.mxu0 0.0
        %1827 = vmatpush.msra.mxu0 %v1808
        %1828 = vmatpush.msra.mxu0 %v1807
        %1829 = vmatpush.msra.mxu0 %v1806
        %1830 = vmatpush.msra.mxu0 %v1805
        %1831 = vmatmul.f32.gmra.mxu0 %v1810
        %v1832 = vpop.f32.mrf.mxu0
        %v1833 = vadd.f32 0.0, %v1832
        %1834 = vmatmul.f32.gmra.mxu0 %v1813
        %v1835 = vpop.f32.mrf.mxu0
        %v1836 = vadd.f32 0.0, %v1835
        %1837 = vdwg.mxu0
        %v1838 = vadd.f32 %v1800, %v1833
        %v1839 = vadd.f32 %v1803, %v1836
        %v1840 = vld [vmem:[%s18] sm:$0xff]
        %v1841 = vld [vmem:[%s18 + $0x8] sm:$0xff]
        %v1842 = vld [vmem:[%s18 + $0x10] sm:$0xff]
        %v1843 = vld [vmem:[%s18 + $0x18] sm:$0xff]
        %v1845 = vsel %vm740, %v1677, 0
        %v1848 = vsel %vm740, %v1678, 0
        %1850 = vmatpush.msra.mxu0 0.0
        %1851 = vmatpush.msra.mxu0 0.0
        %1852 = vmatpush.msra.mxu0 0.0
        %1853 = vmatpush.msra.mxu0 0.0
        %1854 = vmatpush.msra.mxu0 0.0
        %1855 = vmatpush.msra.mxu0 0.0
        %1856 = vmatpush.msra.mxu0 0.0
        %1857 = vmatpush.msra.mxu0 0.0
        %1858 = vmatpush.msra.mxu0 0.0
        %1859 = vmatpush.msra.mxu0 0.0
        %1860 = vmatpush.msra.mxu0 0.0
        %1861 = vmatpush.msra.mxu0 0.0
        %1862 = vmatpush.msra.mxu0 %v1843
        %1863 = vmatpush.msra.mxu0 %v1842
        %1864 = vmatpush.msra.mxu0 %v1841
        %1865 = vmatpush.msra.mxu0 %v1840
        %1866 = vmatmul.f32.gmra.mxu0 %v1845
        %v1867 = vpop.f32.mrf.mxu0
        %v1868 = vadd.f32 0.0, %v1867
        %1869 = vmatmul.f32.gmra.mxu0 %v1848
        %v1870 = vpop.f32.mrf.mxu0
        %v1871 = vadd.f32 0.0, %v1870
        %1872 = vdwg.mxu0
        %v1873 = vadd.f32 %v1838, %v1868
        %v1874 = vadd.f32 %v1839, %v1871
        %v1875 = vld [vmem:[%s19] sm:$0xff]
        %v1876 = vld [vmem:[%s19 + $0x8] sm:$0xff]
        %v1877 = vld [vmem:[%s19 + $0x10] sm:$0xff]
        %v1878 = vld [vmem:[%s19 + $0x18] sm:$0xff]
        %v1880 = vsel %vm740, %v1693, 0
        %v1883 = vsel %vm740, %v1694, 0
        %1885 = vmatpush.msra.mxu0 0.0
        %1886 = vmatpush.msra.mxu0 0.0
        %1887 = vmatpush.msra.mxu0 0.0
        %1888 = vmatpush.msra.mxu0 0.0
        %1889 = vmatpush.msra.mxu0 0.0
        %1890 = vmatpush.msra.mxu0 0.0
        %1891 = vmatpush.msra.mxu0 0.0
        %1892 = vmatpush.msra.mxu0 0.0
        %1893 = vmatpush.msra.mxu0 0.0
        %1894 = vmatpush.msra.mxu0 0.0
        %1895 = vmatpush.msra.mxu0 0.0
        %1896 = vmatpush.msra.mxu0 0.0
        %1897 = vmatpush.msra.mxu0 %v1878
        %1898 = vmatpush.msra.mxu0 %v1877
        %1899 = vmatpush.msra.mxu0 %v1876
        %1900 = vmatpush.msra.mxu0 %v1875
        %1901 = vmatmul.f32.gmra.mxu0 %v1880
        %v1902 = vpop.f32.mrf.mxu0
        %v1903 = vadd.f32 0.0, %v1902
        %1904 = vmatmul.f32.gmra.mxu0 %v1883
        %v1905 = vpop.f32.mrf.mxu0
        %v1906 = vadd.f32 0.0, %v1905
        %1907 = vdwg.mxu0
        %v1908 = vadd.f32 %v1873, %v1903
        %v1909 = vadd.f32 %v1874, %v1906
        %1910 = vst [vmem:[%s715] sm:$0xff] %v1908
        %1911 = vst [vmem:[%s715 + $0x8] sm:$0xff] %v1909
        %s1912 = sand.u32 %s477, 1
        %s1913 = scalar_lea.sflag [#allocation4], %s1912
        %s1914 = sand.u32 %s477, 1
        %s1915 = smul.addr %s1914, 16
        %s1916 = scalar_lea.vmem [#allocation3], %s1915
        // Predicated region
        $region139: #{tpu_custom_call.1} parent=133 // pred_check
          %p1917 = pneg %p487
        $region140: #{tpu_custom_call.1} parent=133 // pred_check_branch
          %1919 = sbr.rel (%p1917) target = $region142
        $region141: #{tpu_custom_call.1} parent=133 // pred_region
          %s1920 = smul.u32 2, %s34
          %1922 = vsyncadd %s1913, 0
          %s1923 = smul.addr %s1920, 8
          %s1924 = scalar_lea.hbm %s20, %s1923
          %s1925 = sshll.u32 %s1916, 4
          %s1926 = int_to_ptr.vmem [resolvable:$true] %s1925
          %s1927 = sshll.u32 %s1924, 4
          %s1928 = int_to_ptr.hbm [resolvable:$true] %s1927
          %1933 = dma.vmem_to_hbm [thread:$0]  %s1926, 256, %s1928, %s1913, 128, 128, 8
        $region142: #{tpu_custom_call.1} parent=133 // pred_fallthru
          _
      $region134: #{tpu_custom_call.1} parent=5 // pred_fallthru
        _
      %p1934 = scmp.le.s32.totalorder 2, %s29
      // Predicated region
      $region143: #{tpu_custom_call.1} parent=5 // pred_check
        %p1935 = pneg %p1934
      $region144: #{tpu_custom_call.1} parent=5 // pred_check_branch
        %1937 = sbr.rel (%p1935) target = $region146
      $region145: #{tpu_custom_call.1} parent=5 // pred_region
        %s1938 = ssub.s32 %s29, 2
        // Predicated region
        $region147: #{tpu_custom_call.1} parent=145 // pred_check
          %p1939 = pneg %p493
        $region148: #{tpu_custom_call.1} parent=145 // pred_check_branch
          %1941 = sbr.rel (%p1939) target = $region150
        $region149: #{tpu_custom_call.1} parent=145 // pred_region
          %s1942 = sand.u32 %s478, 1
          %s1943 = scalar_lea.sflag [#allocation4], %s1942
          %s1944 = sand.u32 %s478, 1
          %s1945 = smul.addr %s1944, 16
          %s1946 = scalar_lea.vmem [#allocation3], %s1945
          %1948 = dma.done %s1943, 256
        $region150: #{tpu_custom_call.1} parent=145 // pred_fallthru
          _
      $region146: #{tpu_custom_call.1} parent=5 // pred_fallthru
        _
    $region6: #{tpu_custom_call.1} parent=1 // loop_footer
      %s33 = sadd.s32 1, %s29
    $region7: #{tpu_custom_call.1} parent=1 // loop_footer_branch
      %28 = sbr.rel target = $region3
    $region8: #{tpu_custom_call.1} parent=1 // loop_exit
      _
    %1949 = vsyncpa [#allocation4], 1
    %s1950 = scalar_lea.sflag [#allocation4], 1
    %1951 = vsyncpa %s1950, 1

</llo_original>
